<compile_context>
chip_gen: v7x
topology: tpu7x:2x2x1
jax: 0.10.0
libtpu: 0.0.40
codegen_flags: <defaults>
</compile_context>

<pallas_src>
import functools

import jax
import jax.numpy as jnp
from jax.experimental import pallas as pl
from jax.experimental.pallas import tpu as pltpu

EPS = 1e-5
LANE = 128


# ---------------------------------------------------------------------------
# small helpers
# ---------------------------------------------------------------------------
def _round_up(v, m):
    return ((v + m - 1) // m) * m


def _pad_to(a, shape):
    pads = [(0, t - s) for s, t in zip(a.shape, shape)]
    if all(p == (0, 0) for p in pads):
        return a
    return jnp.pad(a, pads)


def _strip_rows(h):
    """Pick a row-strip height for the 3x3 conv that divides H."""
    for r in (8, 16, 4, 2):
        if h % r == 0:
            return r
    return h


def _cparams(semantics, vmem_limit_bytes):
    kw = dict(dimension_semantics=semantics)
    if vmem_limit_bytes is not None:
        kw["vmem_limit_bytes"] = vmem_limit_bytes
    return pltpu.CompilerParams(**kw)


def _bn_scale_shift(stats, gamma, beta, count):
    """Finalize BN from per-tile partials (..., 8, C): row0=sum, row1=sum^2."""
    stats = stats.reshape(-1, stats.shape[-2], stats.shape[-1])
    s = jnp.sum(stats[:, 0, :], axis=0)
    sq = jnp.sum(stats[:, 1, :], axis=0)
    mean = s / count
    # NOTE: E[x^2]-E[x]^2 in fp32 from per-tile partials; a Welford combine
    # would be safer for very large M (review correctness note).
    var = jnp.maximum(sq / count - mean * mean, 0.0)
    inv = jax.lax.rsqrt(var + EPS)
    scale = gamma * inv
    shift = beta - mean * scale
    return scale[None, :], shift[None, :]           # (1, C) fp32 each


# ---------------------------------------------------------------------------
# Pallas kernels
# ---------------------------------------------------------------------------
def _stats_rows(y):
    """(rows, C) fp32 -> (8, C): rows 0/1 = sum / sum-of-squares, rest zero."""
    s0 = jnp.sum(y, axis=0, keepdims=True)
    s1 = jnp.sum(y * y, axis=0, keepdims=True)
    return jnp.concatenate(
        [s0, s1, jnp.zeros((6, y.shape[-1]), jnp.float32)], axis=0)


def _mm_stats_kernel(x_ref, w_ref, y_ref, stats_ref):
    """y = x @ w (fp32 acc) + per-tile BN partial sums (parallel grid)."""
    y = jnp.dot(x_ref[...], w_ref[...], preferred_element_type=jnp.float32)
    y_ref[...] = y.astype(y_ref.dtype)
    stats_ref[0] = _stats_rows(y)


def _mm2_stats_kernel(x_ref, wa_ref, wb_ref, ya_ref, yb_ref, sa_ref, sb_ref):
    """Fused conv1 + projection-shortcut 1x1 convs: x read from HBM once."""
    x = x_ref[...]
    ya = jnp.dot(x, wa_ref[...], preferred_element_type=jnp.float32)
    ya_ref[...] = ya.astype(ya_ref.dtype)
    sa_ref[0] = _stats_rows(ya)
    yb = jnp.dot(x, wb_ref[...], preferred_element_type=jnp.float32)
    yb_ref[...] = yb.astype(yb_ref.dtype)
    sb_ref[0] = _stats_rows(yb)


def _bn_relu_mm_stats_kernel(yin_ref, sc_ref, sh_ref, w_ref, y_ref, stats_ref,
                             *, m_total, tm):
    """y = relu(yin*scale + shift) @ w  (fused BN of previous conv) + stats."""
    h = jnp.maximum(
        yin_ref[...].astype(jnp.float32) * sc_ref[...] + sh_ref[...], 0.0)
    y = jnp.dot(h.astype(w_ref.dtype), w_ref[...],
                preferred_element_type=jnp.float32)

    def _finish(yv):
        y_ref[...] = yv.astype(y_ref.dtype)
        stats_ref[0] = _stats_rows(yv)

    if m_total % tm != 0:
        # Only the last row tile holds zero-padded rows (whose relu(shift)@w
        # would otherwise pollute the BN stats); gate the fixup there.
        last = pl.num_programs(0) - 1

        @pl.when(pl.program_id(0) == last)
        def _():
            row = jax.lax.broadcasted_iota(jnp.int32, y.shape, 0)
            _finish(jnp.where(row < m_total - last * tm, y, 0.0))

        @pl.when(pl.program_id(0) != last)
        def _():
            _finish(y)
    else:
        _finish(y)


def _conv3x3_fused_kernel(xpad_ref, sc_ref, sh_ref, w_ref, y_ref, stats_ref,
                          h_ref, acc_ref, *, rs, W, stride):
    """3x3 conv on one row-strip: bn1+relu of the previous conv fused in,
    9 shifted-window MXU taps accumulated in a VMEM fp32 scratch, plus
    per-strip BN2 partial statistics (masked to surviving pixels if strided).
    """
    s = pl.program_id(1)
    cp = h_ref.shape[-1]

    # fused bn1 + relu, written straight to VMEM scratch (no giant SSA value)
    row0 = pl.multiple_of(s * rs, rs)
    xs = xpad_ref[0, pl.ds(row0, rs + 2), :, :].astype(jnp.float32)
    h_ref[...] = jnp.maximum(xs * sc_ref[...] + sh_ref[...], 0.0).astype(
        h_ref.dtype)

    # Re-zero the halo border (relu(shift) of zero padding is non-zero) with
    # cheap static slice stores -- no HBM mask input.
    zcol = jnp.zeros((rs + 2, 1, cp), h_ref.dtype)
    zrow = jnp.zeros((1, W + 2, cp), h_ref.dtype)
    h_ref[:, 0:1, :] = zcol
    h_ref[:, W + 1:W + 2, :] = zcol

    @pl.when(s == 0)
    def _():
        h_ref[0:1, :, :] = zrow

    @pl.when(s == pl.num_programs(1) - 1)
    def _():
        h_ref[rs + 1:rs + 2, :, :] = zrow

    # 9 shifted-window taps accumulated into a VMEM fp32 scratch.
    # TODO(synk): pltpu.roll along W (and the 3-tap K=3*Cp variant) would
    # remove the per-tap relayout of the kj-shifted windows on v5e/v6e.
    t = 0
    for ki in range(3):
        for kj in range(3):
            patch = h_ref[ki:ki + rs, kj:kj + W, :].reshape(rs * W, cp)
            d = jnp.dot(patch, w_ref[t], preferred_element_type=jnp.float32)
            if t == 0:
                acc_ref[...] = d
            else:
                acc_ref[...] += d
            t += 1

    y3d = acc_ref[...].reshape(rs, W, cp)
    y_ref[0] = y3d.astype(y_ref.dtype)

    # BN2 partial statistics; for strided convs only the pixels that survive
    # the subsampling contribute.
    if stride > 1:
        r = jax.lax.broadcasted_iota(jnp.int32, (rs, W, cp), 0) + s * rs
        c = jax.lax.broadcasted_iota(jnp.int32, (rs, W, cp), 1)
        keep = jnp.logical_and(r % stride == 0, c % stride == 0)
        y3d = jnp.where(keep, y3d, 0.0)
    s0 = jnp.sum(jnp.sum(y3d, axis=0), axis=0, keepdims=True)
    s1 = jnp.sum(jnp.sum(y3d * y3d, axis=0), axis=0, keepdims=True)
    stats_ref[0, 0] = jnp.concatenate(
        [s0, s1, jnp.zeros((6, cp), jnp.float32)], axis=0)


def _epilogue_proj_kernel(y3_ref, ys_ref, sc3_ref, sh3_ref, scs_ref, shs_ref,
                          o_ref):
    o = (y3_ref[...].astype(jnp.float32) * sc3_ref[...] + sh3_ref[...]
         + ys_ref[...].astype(jnp.float32) * scs_ref[...] + shs_ref[...])
    o_ref[...] = jnp.maximum(o, 0.0)


def _epilogue_id_kernel(y3_ref, x_ref, sc3_ref, sh3_ref, o_ref):
    o = (y3_ref[...].astype(jnp.float32) * sc3_ref[...] + sh3_ref[...]
         + x_ref[...].astype(jnp.float32))
    o_ref[...] = jnp.maximum(o, 0.0)


# ---------------------------------------------------------------------------
# pallas_call wrappers
# ---------------------------------------------------------------------------
def _matmul_stats(x2d, w2d, tm, out_dtype, vmem_limit_bytes):
    mp, k = x2d.shape
    co = w2d.shape[1]
    nt = mp // tm
    return pl.pallas_call(
        _mm_stats_kernel,
        out_shape=(jax.ShapeDtypeStruct((mp, co), out_dtype),
                   jax.ShapeDtypeStruct((nt, 8, co), jnp.float32)),
        grid=(nt,),
        in_specs=[pl.BlockSpec((tm, k), lambda i: (i, 0)),
                  pl.BlockSpec((k, co), lambda i: (0, 0))],   # weight resident
        out_specs=(pl.BlockSpec((tm, co), lambda i: (i, 0)),
                   pl.BlockSpec((1, 8, co), lambda i: (i, 0, 0))),
        compiler_params=_cparams(("parallel",), vmem_limit_bytes),
    )(x2d, w2d)


def _matmul2_stats(x2d, wa, wb, tm, out_dtype, vmem_limit_bytes):
    mp, k = x2d.shape
    ca, cb = wa.shape[1], wb.shape[1]
    nt = mp // tm
    return pl.pallas_call(
        _mm2_stats_kernel,
        out_shape=(jax.ShapeDtypeStruct((mp, ca), out_dtype),
                   jax.ShapeDtypeStruct((mp, cb), out_dtype),
                   jax.ShapeDtypeStruct((nt, 8, ca), jnp.float32),
                   jax.ShapeDtypeStruct((nt, 8, cb), jnp.float32)),
        grid=(nt,),
        in_specs=[pl.BlockSpec((tm, k), lambda i: (i, 0)),
                  pl.BlockSpec((k, ca), lambda i: (0, 0)),
                  pl.BlockSpec((k, cb), lambda i: (0, 0))],
        out_specs=(pl.BlockSpec((tm, ca), lambda i: (i, 0)),
                   pl.BlockSpec((tm, cb), lambda i: (i, 0)),
                   pl.BlockSpec((1, 8, ca), lambda i: (i, 0, 0)),
                   pl.BlockSpec((1, 8, cb), lambda i: (i, 0, 0))),
        compiler_params=_cparams(("parallel",), vmem_limit_bytes),
    )(x2d, wa, wb)


def _bn_relu_matmul_stats(yin, sc, sh, w2d, tm, m_true, out_dtype,
                          vmem_limit_bytes):
    mp, k = yin.shape
    co = w2d.shape[1]
    nt = mp // tm
    kern = functools.partial(_bn_relu_mm_stats_kernel, m_total=m_true, tm=tm)
    return pl.pallas_call(
        kern,
        out_shape=(jax.ShapeDtypeStruct((mp, co), out_dtype),
                   jax.ShapeDtypeStruct((nt, 8, co), jnp.float32)),
        grid=(nt,),
        in_specs=[pl.BlockSpec((tm, k), lambda i: (i, 0)),
                  pl.BlockSpec((1, k), lambda i: (0, 0)),
                  pl.BlockSpec((1, k), lambda i: (0, 0)),
                  pl.BlockSpec((k, co), lambda i: (0, 0))],
        out_specs=(pl.BlockSpec((tm, co), lambda i: (i, 0)),
                   pl.BlockSpec((1, 8, co), lambda i: (i, 0, 0))),
        compiler_params=_cparams(("parallel",), vmem_limit_bytes),
    )(yin, sc, sh, w2d)


def _conv3x3_fused(y1_pad, sc1, sh1, w2, rs, stride, out_dtype,
                   vmem_limit_bytes):
    n, hp2, wp2, cp = y1_pad.shape
    H, W = hp2 - 2, wp2 - 2
    ns = H // rs
    co = w2.shape[-1]
    kern = functools.partial(_conv3x3_fused_kernel, rs=rs, W=W, stride=stride)
    return pl.pallas_call(
        kern,
        out_shape=(jax.ShapeDtypeStruct((n, H, W, co), out_dtype),
                   jax.ShapeDtypeStruct((n, ns, 8, co), jnp.float32)),
        grid=(n, ns),
        in_specs=[
            # full padded image stays VMEM-resident across its strips
            pl.BlockSpec((1, hp2, wp2, cp), lambda i, s: (i, 0, 0, 0)),
            pl.BlockSpec((1, cp), lambda i, s: (0, 0)),
            pl.BlockSpec((1, cp), lambda i, s: (0, 0)),
            pl.BlockSpec((9, cp, co), lambda i, s: (0, 0, 0)),
        ],
        out_specs=(pl.BlockSpec((1, rs, W, co), lambda i, s: (i, s, 0, 0)),
                   pl.BlockSpec((1, 1, 8, co), lambda i, s: (i, s, 0, 0))),
        scratch_shapes=[pltpu.VMEM((rs + 2, wp2, cp), y1_pad.dtype),
                        pltpu.VMEM((rs * W, co), jnp.float32)],
        compiler_params=_cparams(("parallel", "parallel"), vmem_limit_bytes),
    )(y1_pad, sc1, sh1, w2)


def _epilogue_proj(y3, ys, sc3, sh3, scs, shs, tm, vmem_limit_bytes):
    mp, c = y3.shape
    tile = pl.BlockSpec((tm, c), lambda i: (i, 0))
    vec = pl.BlockSpec((1, c), lambda i: (0, 0))
    return pl.pallas_call(
        _epilogue_proj_kernel,
        out_shape=jax.ShapeDtypeStruct((mp, c), jnp.float32),
        grid=(mp // tm,),
        in_specs=[tile, tile, vec, vec, vec, vec],
        out_specs=pl.BlockSpec((tm, c), lambda i: (i, 0)),
        compiler_params=_cparams(("parallel",), vmem_limit_bytes),
    )(y3, ys, sc3, sh3, scs, shs)


def _epilogue_id(y3, xid, sc3, sh3, tm, vmem_limit_bytes):
    mp, c = y3.shape
    tile = pl.BlockSpec((tm, c), lambda i: (i, 0))
    vec = pl.BlockSpec((1, c), lambda i: (0, 0))
    return pl.pallas_call(
        _epilogue_id_kernel,
        out_shape=jax.ShapeDtypeStruct((mp, c), jnp.float32),
        grid=(mp // tm,),
        in_specs=[tile, tile, vec, vec],
        out_specs=pl.BlockSpec((tm, c), lambda i: (i, 0)),
        compiler_params=_cparams(("parallel",), vmem_limit_bytes),
    )(y3, xid, sc3, sh3)


# ---------------------------------------------------------------------------
# parameters and full forward (NCHW boundary, like the PyTorch module)
# ---------------------------------------------------------------------------
def init_bottleneck_params(key, in_planes, planes, stride, expansion=4):
    keys = jax.random.split(key, 12)
    c4 = expansion * planes

    def bn(i, c):
        g = 1.0 + 0.1 * jax.random.normal(keys[i], (c,), jnp.float32)
        b = 0.1 * jax.random.normal(keys[i + 1], (c,), jnp.float32)
        return g, b

    p = {
        "w1": 0.1 * jax.random.normal(keys[0], (planes, in_planes, 1, 1), jnp.float32),
        "w2": 0.1 * jax.random.normal(keys[1], (planes, planes, 3, 3), jnp.float32),
        "w3": 0.1 * jax.random.normal(keys[2], (c4, planes, 1, 1), jnp.float32),
    }
    p["g1"], p["b1"] = bn(3, planes)
    p["g2"], p["b2"] = bn(5, planes)
    p["g3"], p["b3"] = bn(7, c4)
    if stride != 1 or in_planes != c4:
        p["ws"] = 0.1 * jax.random.normal(keys[9], (c4, in_planes, 1, 1), jnp.float32)
        p["gs"], p["bs"] = bn(10, c4)
    return p


def bottleneck_forward(x_nchw, p, stride=1, expansion=4,
                       compute_dtype=jnp.bfloat16, tm=512,
                       vmem_limit_bytes=None):
    """Training-mode (batch statistics) Bottleneck forward, NCHW in / out."""
    N, Cin, H, W = x_nchw.shape
    planes = p["w1"].shape[0]
    C4 = expansion * planes
    Cin_p, P_p, C4_p = (_round_up(c, LANE) for c in (Cin, planes, C4))
    Ho = (H + 2 - 3) // stride + 1
    Wo = (W + 2 - 3) // stride + 1
    M1, M2 = N * H * W, N * Ho * Wo
    M1p, M2p = _round_up(M1, tm), _round_up(M2, tm)
    has_proj = (stride != 1) or (Cin != C4)

    # NCHW -> NHWC -> (rows, channels): single fused XLA chain.  Padding must
    # stay exactly zero (BN statistics invariant).
    # TODO(synk): accept NHWC / compute_dtype at the module boundary to drop
    # the transpose+cast entirely.
    x_nhwc = jnp.transpose(x_nchw, (0, 2, 3, 1)).astype(jnp.float32)
    x2d = _pad_to(x_nhwc.reshape(M1, Cin), (M1p, Cin_p)).astype(compute_dtype)

    # ---- conv1 (1x1) [+ fused projection shortcut when stride == 1] --------
    w1 = _pad_to(p["w1"][:, :, 0, 0].T, (Cin_p, P_p)).astype(compute_dtype)
    ys = sts = None
    if has_proj and stride == 1:
        ws = _pad_to(p["ws"][:, :, 0, 0].T, (Cin_p, C4_p)).astype(compute_dtype)
        y1, ys, st1, sts = _matmul2_stats(x2d, w1, ws, tm, compute_dtype,
                                          vmem_limit_bytes)
    else:
        y1, st1 = _matmul_stats(x2d, w1, tm, compute_dtype, vmem_limit_bytes)
    sc1, sh1 = _bn_scale_shift(st1, _pad_to(p["g1"], (P_p,)),
                               _pad_to(p["b1"], (P_p,)), M1)

    # ---- conv2 (3x3): bn1+relu fused in, strip-tiled, VMEM accumulator -----
    y1_img = y1[:M1].reshape(N, H, W, P_p)
    y1_pad = jnp.pad(y1_img, ((0, 0), (1, 1), (1, 1), (0, 0)))  # bf16 halo pad
    w2 = _pad_to(jnp.transpose(p["w2"], (2, 3, 1, 0)).reshape(9, planes, planes),
                 (9, P_p, P_p)).astype(compute_dtype)
    rs = _strip_rows(H)
    y2_full, st2 = _conv3x3_fused(y1_pad, sc1, sh1, w2, rs, stride,
                                  compute_dtype, vmem_limit_bytes)
    sc2, sh2 = _bn_scale_shift(st2, _pad_to(p["g2"], (P_p,)),
                               _pad_to(p["b2"], (P_p,)), M2)
    y2_img = y2_full if stride == 1 else y2_full[:, ::stride, ::stride, :]

    # ---- conv3 (1x1): fused bn2-normalize+relu + matmul + BN3 stats --------
    y2_2d = _pad_to(y2_img.reshape(M2, P_p), (M2p, P_p))
    w3 = _pad_to(p["w3"][:, :, 0, 0].T, (P_p, C4_p)).astype(compute_dtype)
    y3, st3 = _bn_relu_matmul_stats(y2_2d, sc2, sh2, w3, tm, M2,
                                    compute_dtype, vmem_limit_bytes)
    sc3, sh3 = _bn_scale_shift(st3, _pad_to(p["g3"], (C4_p,)),
                               _pad_to(p["b3"], (C4_p,)), M2)

    # ---- shortcut branch + residual add + final ReLU ------------------------
    if has_proj:
        if stride != 1:
            xs = x_nhwc[:, ::stride, ::stride, :].reshape(M2, Cin)
            xs = _pad_to(xs, (M2p, Cin_p)).astype(compute_dtype)
            ws = _pad_to(p["ws"][:, :, 0, 0].T, (Cin_p, C4_p)).astype(compute_dtype)
            ys, sts = _matmul_stats(xs, ws, tm, compute_dtype, vmem_limit_bytes)
        scs, shs = _bn_scale_shift(sts, _pad_to(p["gs"], (C4_p,)),
                                   _pad_to(p["bs"], (C4_p,)), M2)
        out2d = _epilogue_proj(y3, ys, sc3, sh3, scs, shs, tm, vmem_limit_bytes)
    else:
        # identity shortcut: x2d is already (M2p, C4_p) in compute dtype
        out2d = _epilogue_id(y3, x2d, sc3, sh3, tm, vmem_limit_bytes)

    out = out2d[:M2, :C4].reshape(N, Ho, Wo, C4)
    # TODO(synk): keep NHWC at the module boundary to drop this transpose.
    return jnp.transpose(out, (0, 3, 1, 2))


# ---------------------------------------------------------------------------
# Pure-JAX reference (correctness check)
# ---------------------------------------------------------------------------
def _ref_conv(x_nhwc, w_oihw, stride, pad):
    return jax.lax.conv_general_dilated(
        x_nhwc, jnp.transpose(w_oihw, (2, 3, 1, 0)),
        window_strides=(stride, stride), padding=[(pad, pad), (pad, pad)],
        dimension_numbers=("NHWC", "HWIO", "NHWC"))


def _ref_bn(y, g, b):
    mean = y.mean(axis=(0, 1, 2), keepdims=True)
    var = ((y - mean) ** 2).mean(axis=(0, 1, 2), keepdims=True)
    return g * (y - mean) / jnp.sqrt(var + EPS) + b


def bottleneck_reference(x_nchw, p, stride=1, expansion=4):
    x = jnp.transpose(x_nchw, (0, 2, 3, 1)).astype(jnp.float32)
    planes = p["w1"].shape[0]
    Cin = x.shape[-1]
    h = jax.nn.relu(_ref_bn(_ref_conv(x, p["w1"], 1, 0), p["g1"], p["b1"]))
    h = jax.nn.relu(_ref_bn(_ref_conv(h, p["w2"], stride, 1), p["g2"], p["b2"]))
    h = _ref_bn(_ref_conv(h, p["w3"], 1, 0), p["g3"], p["b3"])
    if stride != 1 or Cin != expansion * planes:
        s = _ref_bn(_ref_conv(x, p["ws"], stride, 0), p["gs"], p["bs"])
    else:
        s = x
    return jnp.transpose(jax.nn.relu(h + s), (0, 3, 1, 2))


# ---------------------------------------------------------------------------
if __name__ == "__main__":
    key = jax.random.PRNGKey(0)
    kp1, kx1, kp2, kx2, kp3, kx3 = jax.random.split(key, 6)

    # Case 1: projection shortcut (Cin != 4*planes), stride = 1
    params1 = init_bottleneck_params(kp1, 4, 4, 1)
    x1 = jax.random.normal(kx1, (2, 4, 16, 16), jnp.float32)      # NCHW
    ref1 = jax.block_until_ready(bottleneck_reference(x1, params1, 1))
    out1 = jax.block_until_ready(
        bottleneck_forward(x1, params1, 1, compute_dtype=jnp.float32))
    assert out1.shape == ref1.shape == (2, 16, 16, 16), (out1.shape, ref1.shape)
    assert jnp.allclose(out1, ref1, rtol=1e-3, atol=1e-3), \
        float(jnp.abs(out1 - ref1).max())

    # bf16 performance path: bf16 MXU operands + bf16 HBM intermediates
    out1b = jax.block_until_ready(
        bottleneck_forward(x1, params1, 1, compute_dtype=jnp.bfloat16))
    assert out1b.shape == ref1.shape
    assert float(jnp.abs(out1b - ref1).max()) < 0.5

    # Case 2: identity shortcut (Cin == 4*planes), stride = 1
    params2 = init_bottleneck_params(kp2, 16, 4, 1)
    x2 = jax.random.normal(kx2, (2, 16, 16, 16), jnp.float32)
    ref2 = jax.block_until_ready(bottleneck_reference(x2, params2, 1))
    out2 = jax.block_until_ready(
        bottleneck_forward(x2, params2, 1, compute_dtype=jnp.float32))
    assert jnp.allclose(out2, ref2, rtol=1e-3, atol=1e-3), \
        float(jnp.abs(out2 - ref2).max())

    # Case 3: stride = 2 downsampling block with projection shortcut
    params3 = init_bottleneck_params(kp3, 8, 4, 2)
    x3 = jax.random.normal(kx3, (2, 8, 16, 16), jnp.float32)
    ref3 = jax.block_until_ready(bottleneck_reference(x3, params3, 2))
    out3 = jax.block_until_ready(
        bottleneck_forward(x3, params3, 2, compute_dtype=jnp.float32))
    assert out3.shape == ref3.shape == (2, 16, 8, 8), (out3.shape, ref3.shape)
    assert jnp.allclose(out3, ref3, rtol=1e-3, atol=1e-3), \
        float(jnp.abs(out3 - ref3).max())
    out3b = jax.block_until_ready(
        bottleneck_forward(x3, params3, 2, compute_dtype=jnp.bfloat16))
    assert float(jnp.abs(out3b - ref3).max()) < 0.5

    print("KERNEL_OK")
</pallas_src>

<mosaic_0001>
module attributes {stable_mosaic.version = 11 : i64} {
  func.func @_mm2_stats_kernel(%arg0: i32, %arg1: memref<512x128xf32, #tpu.memory_space<vmem>>, %arg2: memref<128x128xf32, #tpu.memory_space<vmem>>, %arg3: memref<128x128xf32, #tpu.memory_space<vmem>>, %arg4: memref<512x128xf32, #tpu.memory_space<vmem>>, %arg5: memref<512x128xf32, #tpu.memory_space<vmem>>, %arg6: memref<1x8x128xf32, #tpu.memory_space<vmem>>, %arg7: memref<1x8x128xf32, #tpu.memory_space<vmem>>) attributes {dimension_semantics = [#tpu.dimension_semantics<parallel>], iteration_bounds = array<i64: 1>, scalar_prefetch = 0 : i64, scratch_operands = 0 : i64, tpu.core_type = #tpu.core_type<tc>, window_params = [{transform_indices = @transform_0, window_bounds = array<i64: 512, 128>}, {pipeline_mode = #tpu.pipeline_mode<synchronous>, transform_indices = @transform_1, window_bounds = array<i64: 128, 128>}, {pipeline_mode = #tpu.pipeline_mode<synchronous>, transform_indices = @transform_2, window_bounds = array<i64: 128, 128>}, {transform_indices = @transform_3, window_bounds = array<i64: 512, 128>}, {transform_indices = @transform_4, window_bounds = array<i64: 512, 128>}, {transform_indices = @transform_5, window_bounds = array<i64: 1, 8, 128>}, {transform_indices = @transform_6, window_bounds = array<i64: 1, 8, 128>}]} {
    %c0 = arith.constant 0 : index
    %c0_0 = arith.constant 0 : index
    %0 = vector.load %arg1[%c0, %c0_0] : memref<512x128xf32, #tpu.memory_space<vmem>>, vector<512x128xf32>
    %c0_1 = arith.constant 0 : index
    %c0_2 = arith.constant 0 : index
    %1 = vector.load %arg2[%c0_1, %c0_2] : memref<128x128xf32, #tpu.memory_space<vmem>>, vector<128x128xf32>
    %cst = arith.constant dense<0.000000e+00> : vector<512x128xf32>
    %2 = tpu.matmul %0, %1, %cst {dimension_numbers = #tpu.dot_dimension_numbers<[1], [0], [0], [1], [0, 0, 1, 1], [], []>} : vector<512x128xf32>, vector<128x128xf32>, vector<512x128xf32> -> vector<512x128xf32>
    %c0_3 = arith.constant 0 : index
    %c0_4 = arith.constant 0 : index
    %3 = vector.load %arg4[%c0_3, %c0_4] : memref<512x128xf32, #tpu.memory_space<vmem>>, vector<512x128xf32>
    tpu.vector_store %arg4[%c0_3, %c0_4], %2 {strides = array<i32>} : memref<512x128xf32, #tpu.memory_space<vmem>>, vector<512x128xf32>,
    %cst_5 = arith.constant dense<0.000000e+00> : vector<128xf32>
    %4 = vector.multi_reduction <add>, %2, %cst_5 [0] : vector<512x128xf32> to vector<128xf32>
    %5 = vector.shape_cast %4 : vector<128xf32> to vector<1x128xf32>
    %6 = arith.mulf %2, %2 : vector<512x128xf32>
    %cst_6 = arith.constant dense<0.000000e+00> : vector<128xf32>
    %7 = vector.multi_reduction <add>, %6, %cst_6 [0] : vector<512x128xf32> to vector<128xf32>
    %8 = vector.shape_cast %7 : vector<128xf32> to vector<1x128xf32>
    %cst_7 = arith.constant 0.000000e+00 : f32
    %9 = vector.broadcast %cst_7 : f32 to vector<6x128xf32>
    %10 = tpu.concatenate %5, %8, %9 in 0 : vector<1x128xf32>, vector<1x128xf32>, vector<6x128xf32> -> vector<8x128xf32>
    %c0_8 = arith.constant 0 : index
    %c0_9 = arith.constant 0 : index
    %c0_10 = arith.constant 0 : index
    %11 = vector.load %arg6[%c0_8, %c0_9, %c0_10] : memref<1x8x128xf32, #tpu.memory_space<vmem>>, vector<1x8x128xf32>
    %12 = vector.shape_cast %11 : vector<1x8x128xf32> to vector<8x128xf32>
    %13 = vector.shape_cast %10 : vector<8x128xf32> to vector<1x8x128xf32>
    tpu.vector_store %arg6[%c0_8, %c0_9, %c0_10], %13 {strides = array<i32>} : memref<1x8x128xf32, #tpu.memory_space<vmem>>, vector<1x8x128xf32>,
    %c0_11 = arith.constant 0 : index
    %c0_12 = arith.constant 0 : index
    %14 = vector.load %arg3[%c0_11, %c0_12] : memref<128x128xf32, #tpu.memory_space<vmem>>, vector<128x128xf32>
    %cst_13 = arith.constant dense<0.000000e+00> : vector<512x128xf32>
    %15 = tpu.matmul %0, %14, %cst_13 {dimension_numbers = #tpu.dot_dimension_numbers<[1], [0], [0], [1], [0, 0, 1, 1], [], []>} : vector<512x128xf32>, vector<128x128xf32>, vector<512x128xf32> -> vector<512x128xf32>
    %c0_14 = arith.constant 0 : index
    %c0_15 = arith.constant 0 : index
    %16 = vector.load %arg5[%c0_14, %c0_15] : memref<512x128xf32, #tpu.memory_space<vmem>>, vector<512x128xf32>
    tpu.vector_store %arg5[%c0_14, %c0_15], %15 {strides = array<i32>} : memref<512x128xf32, #tpu.memory_space<vmem>>, vector<512x128xf32>,
    %cst_16 = arith.constant dense<0.000000e+00> : vector<128xf32>
    %17 = vector.multi_reduction <add>, %15, %cst_16 [0] : vector<512x128xf32> to vector<128xf32>
    %18 = vector.shape_cast %17 : vector<128xf32> to vector<1x128xf32>
    %19 = arith.mulf %15, %15 : vector<512x128xf32>
    %cst_17 = arith.constant dense<0.000000e+00> : vector<128xf32>
    %20 = vector.multi_reduction <add>, %19, %cst_17 [0] : vector<512x128xf32> to vector<128xf32>
    %21 = vector.shape_cast %20 : vector<128xf32> to vector<1x128xf32>
    %cst_18 = arith.constant 0.000000e+00 : f32
    %22 = vector.broadcast %cst_18 : f32 to vector<6x128xf32>
    %23 = tpu.concatenate %18, %21, %22 in 0 : vector<1x128xf32>, vector<1x128xf32>, vector<6x128xf32> -> vector<8x128xf32>
    %c0_19 = arith.constant 0 : index
    %c0_20 = arith.constant 0 : index
    %c0_21 = arith.constant 0 : index
    %24 = vector.load %arg7[%c0_19, %c0_20, %c0_21] : memref<1x8x128xf32, #tpu.memory_space<vmem>>, vector<1x8x128xf32>
    %25 = vector.shape_cast %24 : vector<1x8x128xf32> to vector<8x128xf32>
    %26 = vector.shape_cast %23 : vector<8x128xf32> to vector<1x8x128xf32>
    tpu.vector_store %arg7[%c0_19, %c0_20, %c0_21], %26 {strides = array<i32>} : memref<1x8x128xf32, #tpu.memory_space<vmem>>, vector<1x8x128xf32>,
    return
  }
  func.func @transform_0(%arg0: i32) -> (i32, i32) {
    %c0_i32 = arith.constant 0 : i32
    %c0_i32_0 = arith.constant 0 : i32
    return %arg0, %c0_i32 : i32, i32
  }
  func.func @transform_1(%arg0: i32) -> (i32, i32) {
    %c0_i32 = arith.constant 0 : i32
    %c0_i32_0 = arith.constant 0 : i32
    %c0_i32_1 = arith.constant 0 : i32
    return %c0_i32, %c0_i32_0 : i32, i32
  }
  func.func @transform_2(%arg0: i32) -> (i32, i32) {
    %c0_i32 = arith.constant 0 : i32
    %c0_i32_0 = arith.constant 0 : i32
    %c0_i32_1 = arith.constant 0 : i32
    return %c0_i32, %c0_i32_0 : i32, i32
  }
  func.func @transform_3(%arg0: i32) -> (i32, i32) {
    %c0_i32 = arith.constant 0 : i32
    %c0_i32_0 = arith.constant 0 : i32
    return %arg0, %c0_i32 : i32, i32
  }
  func.func @transform_4(%arg0: i32) -> (i32, i32) {
    %c0_i32 = arith.constant 0 : i32
    %c0_i32_0 = arith.constant 0 : i32
    return %arg0, %c0_i32 : i32, i32
  }
  func.func @transform_5(%arg0: i32) -> (i32, i32, i32) {
    %c0_i32 = arith.constant 0 : i32
    %c0_i32_0 = arith.constant 0 : i32
    %c0_i32_1 = arith.constant 0 : i32
    return %arg0, %c0_i32, %c0_i32_0 : i32, i32, i32
  }
  func.func @transform_6(%arg0: i32) -> (i32, i32, i32) {
    %c0_i32 = arith.constant 0 : i32
    %c0_i32_0 = arith.constant 0 : i32
    %c0_i32_1 = arith.constant 0 : i32
    return %arg0, %c0_i32, %c0_i32_0 : i32, i32, i32
  }
}

</mosaic_0001>

<llo_original>
// kernel: tpu_custom_call.1
$region0: #{tpu_custom_call.1}
  #allocation0 [shape = 'u32[]', space=smem, size = 0x4, offset = 0x4, fixed_abs, tag = 'smem constant byte address 0x4 - core index']
  #allocation1 [shape = 'u32[144,128]{1,0:T(1,128)}', space=vmem, size = 0x12000, scoped, tag = 'internal scratch']
  %s0 = inlined_call_operand.hbm [shape: f32[512,128], index: 0, kind: input, shape index: {}]
  %s1 = inlined_call_operand.hbm [shape: f32[128,128], index: 1, kind: input, shape index: {}]
  %s2 = inlined_call_operand.hbm [shape: f32[128,128], index: 2, kind: input, shape index: {}]
  %s3 = inlined_call_operand.hbm [shape: f32[512,128], index: 3, kind: output, shape index: {0}]
  %s4 = inlined_call_operand.hbm [shape: f32[512,128], index: 4, kind: output, shape index: {1}]
  %s5 = inlined_call_operand.hbm [shape: f32[1,8,128], index: 5, kind: output, shape index: {2}]
  %s6 = inlined_call_operand.hbm [shape: f32[1,8,128], index: 6, kind: output, shape index: {3}]
  %7 = xla_tuple %s3, %s4, %s5, %s6
  %s8 = sld [smem:[#allocation0]]
  $region58: #{tpu_custom_call.1} parent=0
    _
  %s10 = ssub.s32 1, %s8
  %s11 = scalar_select 0, %s10, %s8
  $region1: #{tpu_custom_call.1} parent=0
    #allocation2 [shape = 'u8[262144]{0}', space=vmem, size = 0x40000, scoped, tag = 'input window, operand 0, single buffered']
    #allocation3 [shape = 's32[1]{0}', space=sflag, size = 0x4, scoped, tag = 'scoped memory for tpu_custom_call.1']
    #allocation4 [shape = 's32[1]{0}', space=sflag, size = 0x4, scoped, tag = 'scoped memory for tpu_custom_call.1']
    #allocation5 [shape = 'u8[65536]{0}', space=vmem, size = 0x10000, scoped, tag = 'input window, operand 1, single buffered']
    #allocation6 [shape = 's32[1]{0}', space=sflag, size = 0x4, scoped, tag = 'scoped memory for tpu_custom_call.1']
    #allocation7 [shape = 'u8[65536]{0}', space=vmem, size = 0x10000, scoped, tag = 'input window, operand 2, single buffered']
    #allocation8 [shape = 'u8[262144]{0}', space=vmem, size = 0x40000, scoped, tag = 'output window, operand 0, single buffered']
    #allocation9 [shape = 'u8[262144]{0}', space=vmem, size = 0x40000, scoped, tag = 'output window, operand 1, single buffered']
    #allocation10 [shape = 's32[1]{0}', space=sflag, size = 0x4, scoped, tag = 'scoped memory for tpu_custom_call.1']
    #allocation11 [shape = 'u8[4096]{0}', space=vmem, size = 0x1000, scoped, tag = 'output window, operand 2, single buffered']
    #allocation12 [shape = 'u8[4096]{0}', space=vmem, size = 0x1000, scoped, tag = 'output window, operand 3, single buffered']
    #allocation13 [shape = 's32[1]{0}', space=sflag, size = 0x4, scoped, tag = 'scoped memory for tpu_custom_call.1']
    %12 = vsyncpa [#allocation3], 0
    %13 = vsyncpa [#allocation6], 0
    %14 = vsyncpa [#allocation4], 0
    %15 = vsyncpa [#allocation10], 0
    %16 = vsyncpa [#allocation13], 0
    // Predicated region
    $region2: #{tpu_custom_call.1} parent=1 // pred_check
      _
    $region3: #{tpu_custom_call.1} parent=1 // pred_check_branch
      %18 = sbr.rel (0) target = $region5
    $region4: #{tpu_custom_call.1} parent=1 // pred_region
      %s20 = ssub.s32 8192, 8192
      %21 = vsyncadd [#allocation3], %s20
      %s22 = sshll.u32 [#allocation2], 4
      %s23 = int_to_ptr.vmem [resolvable:$true] %s22
      %28 = dma.hbm_to_vmem [thread:$0]  %s0, 8192, %s23, [#allocation3], 128, 128, 8
    $region5: #{tpu_custom_call.1} parent=1 // pred_fallthru
      _
    // Predicated region
    $region6: #{tpu_custom_call.1} parent=1 // pred_check
      _
    $region7: #{tpu_custom_call.1} parent=1 // pred_check_branch
      %30 = sbr.rel (0) target = $region9
    $region8: #{tpu_custom_call.1} parent=1 // pred_region
      %s32 = ssub.s32 2048, 2048
      %33 = vsyncadd [#allocation6], %s32
      %s34 = sshll.u32 [#allocation5], 4
      %s35 = int_to_ptr.vmem [resolvable:$true] %s34
      %40 = dma.hbm_to_vmem [thread:$0]  %s1, 2048, %s35, [#allocation6], 128, 128, 8
    $region9: #{tpu_custom_call.1} parent=1 // pred_fallthru
      _
    // Predicated region
    $region10: #{tpu_custom_call.1} parent=1 // pred_check
      _
    $region11: #{tpu_custom_call.1} parent=1 // pred_check_branch
      %42 = sbr.rel (0) target = $region13
    $region12: #{tpu_custom_call.1} parent=1 // pred_region
      %s44 = ssub.s32 2048, 2048
      %45 = vsyncadd [#allocation6], %s44
      %s46 = sshll.u32 [#allocation7], 4
      %s47 = int_to_ptr.vmem [resolvable:$true] %s46
      %52 = dma.hbm_to_vmem [thread:$0]  %s2, 2048, %s47, [#allocation6], 128, 128, 8
    $region13: #{tpu_custom_call.1} parent=1 // pred_fallthru
      _
    // Predicated region
    $region14: #{tpu_custom_call.1} parent=1 // pred_check
      _
    $region15: #{tpu_custom_call.1} parent=1 // pred_check_branch
      %54 = sbr.rel (0) target = $region17
    $region16: #{tpu_custom_call.1} parent=1 // pred_region
      %55 = dma.done [#allocation3], 8192
    $region17: #{tpu_custom_call.1} parent=1 // pred_fallthru
      _
    // Predicated region
    $region18: #{tpu_custom_call.1} parent=1 // pred_check
      _
    $region19: #{tpu_custom_call.1} parent=1 // pred_check_branch
      %57 = sbr.rel (0) target = $region21
    $region20: #{tpu_custom_call.1} parent=1 // pred_region
      %58 = dma.done [#allocation6], 2048
    $region21: #{tpu_custom_call.1} parent=1 // pred_fallthru
      _
    // Predicated region
    $region22: #{tpu_custom_call.1} parent=1 // pred_check
      _
    $region23: #{tpu_custom_call.1} parent=1 // pred_check_branch
      %60 = sbr.rel (0) target = $region25
    $region24: #{tpu_custom_call.1} parent=1 // pred_region
      %61 = dma.done [#allocation6], 2048
    $region25: #{tpu_custom_call.1} parent=1 // pred_fallthru
      _
    %v62 = vld [vmem:[#allocation2] sm:$0xff]
    %v63 = vld [vmem:[#allocation2 + $0x8] sm:$0xff]
    %v64 = vld [vmem:[#allocation2 + $0x10] sm:$0xff]
    %v65 = vld [vmem:[#allocation2 + $0x18] sm:$0xff]
    %v66 = vld [vmem:[#allocation2 + $0x20] sm:$0xff]
    %v67 = vld [vmem:[#allocation2 + $0x28] sm:$0xff]
    %v68 = vld [vmem:[#allocation2 + $0x30] sm:$0xff]
    %v69 = vld [vmem:[#allocation2 + $0x38] sm:$0xff]
    %v70 = vld [vmem:[#allocation2 + $0x40] sm:$0xff]
    %v71 = vld [vmem:[#allocation2 + $0x48] sm:$0xff]
    %v72 = vld [vmem:[#allocation2 + $0x50] sm:$0xff]
    %v73 = vld [vmem:[#allocation2 + $0x58] sm:$0xff]
    %v74 = vld [vmem:[#allocation2 + $0x60] sm:$0xff]
    %v75 = vld [vmem:[#allocation2 + $0x68] sm:$0xff]
    %v76 = vld [vmem:[#allocation2 + $0x70] sm:$0xff]
    %v77 = vld [vmem:[#allocation2 + $0x78] sm:$0xff]
    %v78 = vld [vmem:[#allocation2 + $0x80] sm:$0xff]
    %v79 = vld [vmem:[#allocation2 + $0x88] sm:$0xff]
    %v80 = vld [vmem:[#allocation2 + $0x90] sm:$0xff]
    %v81 = vld [vmem:[#allocation2 + $0x98] sm:$0xff]
    %v82 = vld [vmem:[#allocation2 + $0xa0] sm:$0xff]
    %v83 = vld [vmem:[#allocation2 + $0xa8] sm:$0xff]
    %v84 = vld [vmem:[#allocation2 + $0xb0] sm:$0xff]
    %v85 = vld [vmem:[#allocation2 + $0xb8] sm:$0xff]
    %v86 = vld [vmem:[#allocation2 + $0xc0] sm:$0xff]
    %v87 = vld [vmem:[#allocation2 + $0xc8] sm:$0xff]
    %v88 = vld [vmem:[#allocation2 + $0xd0] sm:$0xff]
    %v89 = vld [vmem:[#allocation2 + $0xd8] sm:$0xff]
    %v90 = vld [vmem:[#allocation2 + $0xe0] sm:$0xff]
    %v91 = vld [vmem:[#allocation2 + $0xe8] sm:$0xff]
    %v92 = vld [vmem:[#allocation2 + $0xf0] sm:$0xff]
    %v93 = vld [vmem:[#allocation2 + $0xf8] sm:$0xff]
    %v94 = vld [vmem:[#allocation2 + $0x100] sm:$0xff]
    %v95 = vld [vmem:[#allocation2 + $0x108] sm:$0xff]
    %v96 = vld [vmem:[#allocation2 + $0x110] sm:$0xff]
    %v97 = vld [vmem:[#allocation2 + $0x118] sm:$0xff]
    %v98 = vld [vmem:[#allocation2 + $0x120] sm:$0xff]
    %v99 = vld [vmem:[#allocation2 + $0x128] sm:$0xff]
    %v100 = vld [vmem:[#allocation2 + $0x130] sm:$0xff]
    %v101 = vld [vmem:[#allocation2 + $0x138] sm:$0xff]
    %v102 = vld [vmem:[#allocation2 + $0x140] sm:$0xff]
    %v103 = vld [vmem:[#allocation2 + $0x148] sm:$0xff]
    %v104 = vld [vmem:[#allocation2 + $0x150] sm:$0xff]
    %v105 = vld [vmem:[#allocation2 + $0x158] sm:$0xff]
    %v106 = vld [vmem:[#allocation2 + $0x160] sm:$0xff]
    %v107 = vld [vmem:[#allocation2 + $0x168] sm:$0xff]
    %v108 = vld [vmem:[#allocation2 + $0x170] sm:$0xff]
    %v109 = vld [vmem:[#allocation2 + $0x178] sm:$0xff]
    %v110 = vld [vmem:[#allocation2 + $0x180] sm:$0xff]
    %v111 = vld [vmem:[#allocation2 + $0x188] sm:$0xff]
    %v112 = vld [vmem:[#allocation2 + $0x190] sm:$0xff]
    %v113 = vld [vmem:[#allocation2 + $0x198] sm:$0xff]
    %v114 = vld [vmem:[#allocation2 + $0x1a0] sm:$0xff]
    %v115 = vld [vmem:[#allocation2 + $0x1a8] sm:$0xff]
    %v116 = vld [vmem:[#allocation2 + $0x1b0] sm:$0xff]
    %v117 = vld [vmem:[#allocation2 + $0x1b8] sm:$0xff]
    %v118 = vld [vmem:[#allocation2 + $0x1c0] sm:$0xff]
    %v119 = vld [vmem:[#allocation2 + $0x1c8] sm:$0xff]
    %v120 = vld [vmem:[#allocation2 + $0x1d0] sm:$0xff]
    %v121 = vld [vmem:[#allocation2 + $0x1d8] sm:$0xff]
    %v122 = vld [vmem:[#allocation2 + $0x1e0] sm:$0xff]
    %v123 = vld [vmem:[#allocation2 + $0x1e8] sm:$0xff]
    %v124 = vld [vmem:[#allocation2 + $0x1f0] sm:$0xff]
    %v125 = vld [vmem:[#allocation2 + $0x1f8] sm:$0xff]
    %v126 = vld [vmem:[#allocation5] sm:$0xff]
    %v127 = vld [vmem:[#allocation5 + $0x8] sm:$0xff]
    %v128 = vld [vmem:[#allocation5 + $0x10] sm:$0xff]
    %v129 = vld [vmem:[#allocation5 + $0x18] sm:$0xff]
    %v130 = vld [vmem:[#allocation5 + $0x20] sm:$0xff]
    %v131 = vld [vmem:[#allocation5 + $0x28] sm:$0xff]
    %v132 = vld [vmem:[#allocation5 + $0x30] sm:$0xff]
    %v133 = vld [vmem:[#allocation5 + $0x38] sm:$0xff]
    %v134 = vld [vmem:[#allocation5 + $0x40] sm:$0xff]
    %v135 = vld [vmem:[#allocation5 + $0x48] sm:$0xff]
    %v136 = vld [vmem:[#allocation5 + $0x50] sm:$0xff]
    %v137 = vld [vmem:[#allocation5 + $0x58] sm:$0xff]
    %v138 = vld [vmem:[#allocation5 + $0x60] sm:$0xff]
    %v139 = vld [vmem:[#allocation5 + $0x68] sm:$0xff]
    %v140 = vld [vmem:[#allocation5 + $0x70] sm:$0xff]
    %v141 = vld [vmem:[#allocation5 + $0x78] sm:$0xff]
    %142 = vmatprep.subr.mxu0 0.0
    %143 = vmatpush1.msra.mxu0 %v126
    %144 = vmatprep.subr.mxu0 0.0
    %145 = vmatpush1.msra.mxu0 %v127
    %146 = vmatprep.subr.mxu0 0.0
    %147 = vmatpush1.msra.mxu0 %v128
    %148 = vmatprep.subr.mxu0 0.0
    %149 = vmatpush1.msra.mxu0 %v129
    %150 = vmatprep.subr.mxu0 0.0
    %151 = vmatpush1.msra.mxu0 %v130
    %152 = vmatprep.subr.mxu0 0.0
    %153 = vmatpush1.msra.mxu0 %v131
    %154 = vmatprep.subr.mxu0 0.0
    %155 = vmatpush1.msra.mxu0 %v132
    %156 = vmatprep.subr.mxu0 0.0
    %157 = vmatpush1.msra.mxu0 %v133
    %158 = vmatprep.subr.mxu0 0.0
    %159 = vmatpush1.msra.mxu0 %v134
    %160 = vmatprep.subr.mxu0 0.0
    %161 = vmatpush1.msra.mxu0 %v135
    %162 = vmatprep.subr.mxu0 0.0
    %163 = vmatpush1.msra.mxu0 %v136
    %164 = vmatprep.subr.mxu0 0.0
    %165 = vmatpush1.msra.mxu0 %v137
    %166 = vmatprep.subr.mxu0 0.0
    %167 = vmatpush1.msra.mxu0 %v138
    %168 = vmatprep.subr.mxu0 0.0
    %169 = vmatpush1.msra.mxu0 %v139
    %170 = vmatprep.subr.mxu0 0.0
    %171 = vmatpush1.msra.mxu0 %v140
    %172 = vmatprep.subr.mxu0 0.0
    %173 = vmatpush1.msra.mxu0 %v141
    %174 = vmatprep.subr.mxu0 0.0
    %175 = vmatpush1.msra.mxu0 0.0
    %176 = vmatprep.subr.mxu0 0.0
    %177 = vmatpush1.msra.mxu0 0.0
    %178 = vmatprep.subr.mxu0 0.0
    %179 = vmatpush1.msra.mxu0 0.0
    %180 = vmatprep.subr.mxu0 0.0
    %181 = vmatpush1.msra.mxu0 0.0
    %182 = vmatprep.subr.mxu0 0.0
    %183 = vmatpush1.msra.mxu0 0.0
    %184 = vmatprep.subr.mxu0 0.0
    %185 = vmatpush1.msra.mxu0 0.0
    %186 = vmatprep.subr.mxu0 0.0
    %187 = vmatpush1.msra.mxu0 0.0
    %188 = vmatprep.subr.mxu0 0.0
    %189 = vmatpush1.msra.mxu0 0.0
    %190 = vmatprep.subr.mxu0 0.0
    %191 = vmatpush1.msra.mxu0 0.0
    %192 = vmatprep.subr.mxu0 0.0
    %193 = vmatpush1.msra.mxu0 0.0
    %194 = vmatprep.subr.mxu0 0.0
    %195 = vmatpush1.msra.mxu0 0.0
    %196 = vmatprep.subr.mxu0 0.0
    %197 = vmatpush1.msra.mxu0 0.0
    %198 = vmatprep.subr.mxu0 0.0
    %199 = vmatpush1.msra.mxu0 0.0
    %200 = vmatprep.subr.mxu0 0.0
    %201 = vmatpush1.msra.mxu0 0.0
    %202 = vmatprep.subr.mxu0 0.0
    %203 = vmatpush1.msra.mxu0 0.0
    %204 = vmatprep.subr.mxu0 0.0
    %205 = vmatpush1.msra.mxu0 0.0
    %206 = vmatprep.mubr.f32.mxu0 0.0
    %207 = vmatmul.mubr.f32.gmra.mrb[0].mxu0 %v62
    %v208 = vpop.f32.mrb[0].mxu0
    %v209 = vadd.f32 0.0, %v208
    %v210 = vpop.f32.mrb[0].mxu0
    %211 = vmatprep.mubr.f32.mxu0 0.0
    %212 = vmatmul.mubr.f32.gmra.mrb[0].mxu0 %v63
    %v213 = vpop.f32.mrb[0].mxu0
    %v214 = vadd.f32 0.0, %v213
    %v215 = vpop.f32.mrb[0].mxu0
    %216 = vmatprep.mubr.f32.mxu0 0.0
    %217 = vmatmul.mubr.f32.gmra.mrb[0].mxu0 %v64
    %v218 = vpop.f32.mrb[0].mxu0
    %v219 = vadd.f32 0.0, %v218
    %v220 = vpop.f32.mrb[0].mxu0
    %221 = vmatprep.mubr.f32.mxu0 0.0
    %222 = vmatmul.mubr.f32.gmra.mrb[0].mxu0 %v65
    %v223 = vpop.f32.mrb[0].mxu0
    %v224 = vadd.f32 0.0, %v223
    %v225 = vpop.f32.mrb[0].mxu0
    %226 = vmatprep.mubr.f32.mxu0 0.0
    %227 = vmatmul.mubr.f32.gmra.mrb[0].mxu0 %v66
    %v228 = vpop.f32.mrb[0].mxu0
    %v229 = vadd.f32 0.0, %v228
    %v230 = vpop.f32.mrb[0].mxu0
    %231 = vmatprep.mubr.f32.mxu0 0.0
    %232 = vmatmul.mubr.f32.gmra.mrb[0].mxu0 %v67
    %v233 = vpop.f32.mrb[0].mxu0
    %v234 = vadd.f32 0.0, %v233
    %v235 = vpop.f32.mrb[0].mxu0
    %236 = vmatprep.mubr.f32.mxu0 0.0
    %237 = vmatmul.mubr.f32.gmra.mrb[0].mxu0 %v68
    %v238 = vpop.f32.mrb[0].mxu0
    %v239 = vadd.f32 0.0, %v238
    %v240 = vpop.f32.mrb[0].mxu0
    %241 = vmatprep.mubr.f32.mxu0 0.0
    %242 = vmatmul.mubr.f32.gmra.mrb[0].mxu0 %v69
    %v243 = vpop.f32.mrb[0].mxu0
    %v244 = vadd.f32 0.0, %v243
    %v245 = vpop.f32.mrb[0].mxu0
    %246 = vmatprep.mubr.f32.mxu0 0.0
    %247 = vmatmul.mubr.f32.gmra.mrb[0].mxu0 %v70
    %v248 = vpop.f32.mrb[0].mxu0
    %v249 = vadd.f32 0.0, %v248
    %v250 = vpop.f32.mrb[0].mxu0
    %251 = vmatprep.mubr.f32.mxu0 0.0
    %252 = vmatmul.mubr.f32.gmra.mrb[0].mxu0 %v71
    %v253 = vpop.f32.mrb[0].mxu0
    %v254 = vadd.f32 0.0, %v253
    %v255 = vpop.f32.mrb[0].mxu0
    %256 = vmatprep.mubr.f32.mxu0 0.0
    %257 = vmatmul.mubr.f32.gmra.mrb[0].mxu0 %v72
    %v258 = vpop.f32.mrb[0].mxu0
    %v259 = vadd.f32 0.0, %v258
    %v260 = vpop.f32.mrb[0].mxu0
    %261 = vmatprep.mubr.f32.mxu0 0.0
    %262 = vmatmul.mubr.f32.gmra.mrb[0].mxu0 %v73
    %v263 = vpop.f32.mrb[0].mxu0
    %v264 = vadd.f32 0.0, %v263
    %v265 = vpop.f32.mrb[0].mxu0
    %266 = vmatprep.mubr.f32.mxu0 0.0
    %267 = vmatmul.mubr.f32.gmra.mrb[0].mxu0 %v74
    %v268 = vpop.f32.mrb[0].mxu0
    %v269 = vadd.f32 0.0, %v268
    %v270 = vpop.f32.mrb[0].mxu0
    %271 = vmatprep.mubr.f32.mxu0 0.0
    %272 = vmatmul.mubr.f32.gmra.mrb[0].mxu0 %v75
    %v273 = vpop.f32.mrb[0].mxu0
    %v274 = vadd.f32 0.0, %v273
    %v275 = vpop.f32.mrb[0].mxu0
    %276 = vmatprep.mubr.f32.mxu0 0.0
    %277 = vmatmul.mubr.f32.gmra.mrb[0].mxu0 %v76
    %v278 = vpop.f32.mrb[0].mxu0
    %v279 = vadd.f32 0.0, %v278
    %v280 = vpop.f32.mrb[0].mxu0
    %281 = vmatprep.mubr.f32.mxu0 0.0
    %282 = vmatmul.mubr.f32.gmra.mrb[0].mxu0 %v77
    %v283 = vpop.f32.mrb[0].mxu0
    %v284 = vadd.f32 0.0, %v283
    %v285 = vpop.f32.mrb[0].mxu0
    %286 = vmatprep.mubr.f32.mxu0 0.0
    %287 = vmatmul.mubr.f32.gmra.mrb[0].mxu0 %v78
    %v288 = vpop.f32.mrb[0].mxu0
    %v289 = vadd.f32 0.0, %v288
    %v290 = vpop.f32.mrb[0].mxu0
    %291 = vmatprep.mubr.f32.mxu0 0.0
    %292 = vmatmul.mubr.f32.gmra.mrb[0].mxu0 %v79
    %v293 = vpop.f32.mrb[0].mxu0
    %v294 = vadd.f32 0.0, %v293
    %v295 = vpop.f32.mrb[0].mxu0
    %296 = vmatprep.mubr.f32.mxu0 0.0
    %297 = vmatmul.mubr.f32.gmra.mrb[0].mxu0 %v80
    %v298 = vpop.f32.mrb[0].mxu0
    %v299 = vadd.f32 0.0, %v298
    %v300 = vpop.f32.mrb[0].mxu0
    %301 = vmatprep.mubr.f32.mxu0 0.0
    %302 = vmatmul.mubr.f32.gmra.mrb[0].mxu0 %v81
    %v303 = vpop.f32.mrb[0].mxu0
    %v304 = vadd.f32 0.0, %v303
    %v305 = vpop.f32.mrb[0].mxu0
    %306 = vmatprep.mubr.f32.mxu0 0.0
    %307 = vmatmul.mubr.f32.gmra.mrb[0].mxu0 %v82
    %v308 = vpop.f32.mrb[0].mxu0
    %v309 = vadd.f32 0.0, %v308
    %v310 = vpop.f32.mrb[0].mxu0
    %311 = vmatprep.mubr.f32.mxu0 0.0
    %312 = vmatmul.mubr.f32.gmra.mrb[0].mxu0 %v83
    %v313 = vpop.f32.mrb[0].mxu0
    %v314 = vadd.f32 0.0, %v313
    %v315 = vpop.f32.mrb[0].mxu0
    %316 = vmatprep.mubr.f32.mxu0 0.0
    %317 = vmatmul.mubr.f32.gmra.mrb[0].mxu0 %v84
    %v318 = vpop.f32.mrb[0].mxu0
    %v319 = vadd.f32 0.0, %v318
    %v320 = vpop.f32.mrb[0].mxu0
    %321 = vmatprep.mubr.f32.mxu0 0.0
    %322 = vmatmul.mubr.f32.gmra.mrb[0].mxu0 %v85
    %v323 = vpop.f32.mrb[0].mxu0
    %v324 = vadd.f32 0.0, %v323
    %v325 = vpop.f32.mrb[0].mxu0
    %326 = vmatprep.mubr.f32.mxu0 0.0
    %327 = vmatmul.mubr.f32.gmra.mrb[0].mxu0 %v86
    %v328 = vpop.f32.mrb[0].mxu0
    %v329 = vadd.f32 0.0, %v328
    %v330 = vpop.f32.mrb[0].mxu0
    %331 = vmatprep.mubr.f32.mxu0 0.0
    %332 = vmatmul.mubr.f32.gmra.mrb[0].mxu0 %v87
    %v333 = vpop.f32.mrb[0].mxu0
    %v334 = vadd.f32 0.0, %v333
    %v335 = vpop.f32.mrb[0].mxu0
    %336 = vmatprep.mubr.f32.mxu0 0.0
    %337 = vmatmul.mubr.f32.gmra.mrb[0].mxu0 %v88
    %v338 = vpop.f32.mrb[0].mxu0
    %v339 = vadd.f32 0.0, %v338
    %v340 = vpop.f32.mrb[0].mxu0
    %341 = vmatprep.mubr.f32.mxu0 0.0
    %342 = vmatmul.mubr.f32.gmra.mrb[0].mxu0 %v89
    %v343 = vpop.f32.mrb[0].mxu0
    %v344 = vadd.f32 0.0, %v343
    %v345 = vpop.f32.mrb[0].mxu0
    %346 = vmatprep.mubr.f32.mxu0 0.0
    %347 = vmatmul.mubr.f32.gmra.mrb[0].mxu0 %v90
    %v348 = vpop.f32.mrb[0].mxu0
    %v349 = vadd.f32 0.0, %v348
    %v350 = vpop.f32.mrb[0].mxu0
    %351 = vmatprep.mubr.f32.mxu0 0.0
    %352 = vmatmul.mubr.f32.gmra.mrb[0].mxu0 %v91
    %v353 = vpop.f32.mrb[0].mxu0
    %v354 = vadd.f32 0.0, %v353
    %v355 = vpop.f32.mrb[0].mxu0
    %356 = vmatprep.mubr.f32.mxu0 0.0
    %357 = vmatmul.mubr.f32.gmra.mrb[0].mxu0 %v92
    %v358 = vpop.f32.mrb[0].mxu0
    %v359 = vadd.f32 0.0, %v358
    %v360 = vpop.f32.mrb[0].mxu0
    %361 = vmatprep.mubr.f32.mxu0 0.0
    %362 = vmatmul.mubr.f32.gmra.mrb[0].mxu0 %v93
    %v363 = vpop.f32.mrb[0].mxu0
    %v364 = vadd.f32 0.0, %v363
    %v365 = vpop.f32.mrb[0].mxu0
    %366 = vmatprep.mubr.f32.mxu0 0.0
    %367 = vmatmul.mubr.f32.gmra.mrb[0].mxu0 %v94
    %v368 = vpop.f32.mrb[0].mxu0
    %v369 = vadd.f32 0.0, %v368
    %v370 = vpop.f32.mrb[0].mxu0
    %371 = vmatprep.mubr.f32.mxu0 0.0
    %372 = vmatmul.mubr.f32.gmra.mrb[0].mxu0 %v95
    %v373 = vpop.f32.mrb[0].mxu0
    %v374 = vadd.f32 0.0, %v373
    %v375 = vpop.f32.mrb[0].mxu0
    %376 = vmatprep.mubr.f32.mxu0 0.0
    %377 = vmatmul.mubr.f32.gmra.mrb[0].mxu0 %v96
    %v378 = vpop.f32.mrb[0].mxu0
    %v379 = vadd.f32 0.0, %v378
    %v380 = vpop.f32.mrb[0].mxu0
    %381 = vmatprep.mubr.f32.mxu0 0.0
    %382 = vmatmul.mubr.f32.gmra.mrb[0].mxu0 %v97
    %v383 = vpop.f32.mrb[0].mxu0
    %v384 = vadd.f32 0.0, %v383
    %v385 = vpop.f32.mrb[0].mxu0
    %386 = vmatprep.mubr.f32.mxu0 0.0
    %387 = vmatmul.mubr.f32.gmra.mrb[0].mxu0 %v98
    %v388 = vpop.f32.mrb[0].mxu0
    %v389 = vadd.f32 0.0, %v388
    %v390 = vpop.f32.mrb[0].mxu0
    %391 = vmatprep.mubr.f32.mxu0 0.0
    %392 = vmatmul.mubr.f32.gmra.mrb[0].mxu0 %v99
    %v393 = vpop.f32.mrb[0].mxu0
    %v394 = vadd.f32 0.0, %v393
    %v395 = vpop.f32.mrb[0].mxu0
    %396 = vmatprep.mubr.f32.mxu0 0.0
    %397 = vmatmul.mubr.f32.gmra.mrb[0].mxu0 %v100
    %v398 = vpop.f32.mrb[0].mxu0
    %v399 = vadd.f32 0.0, %v398
    %v400 = vpop.f32.mrb[0].mxu0
    %401 = vmatprep.mubr.f32.mxu0 0.0
    %402 = vmatmul.mubr.f32.gmra.mrb[0].mxu0 %v101
    %v403 = vpop.f32.mrb[0].mxu0
    %v404 = vadd.f32 0.0, %v403
    %v405 = vpop.f32.mrb[0].mxu0
    %406 = vmatprep.mubr.f32.mxu0 0.0
    %407 = vmatmul.mubr.f32.gmra.mrb[0].mxu0 %v102
    %v408 = vpop.f32.mrb[0].mxu0
    %v409 = vadd.f32 0.0, %v408
    %v410 = vpop.f32.mrb[0].mxu0
    %411 = vmatprep.mubr.f32.mxu0 0.0
    %412 = vmatmul.mubr.f32.gmra.mrb[0].mxu0 %v103
    %v413 = vpop.f32.mrb[0].mxu0
    %v414 = vadd.f32 0.0, %v413
    %v415 = vpop.f32.mrb[0].mxu0
    %416 = vmatprep.mubr.f32.mxu0 0.0
    %417 = vmatmul.mubr.f32.gmra.mrb[0].mxu0 %v104
    %v418 = vpop.f32.mrb[0].mxu0
    %v419 = vadd.f32 0.0, %v418
    %v420 = vpop.f32.mrb[0].mxu0
    %421 = vmatprep.mubr.f32.mxu0 0.0
    %422 = vmatmul.mubr.f32.gmra.mrb[0].mxu0 %v105
    %v423 = vpop.f32.mrb[0].mxu0
    %v424 = vadd.f32 0.0, %v423
    %v425 = vpop.f32.mrb[0].mxu0
    %426 = vmatprep.mubr.f32.mxu0 0.0
    %427 = vmatmul.mubr.f32.gmra.mrb[0].mxu0 %v106
    %v428 = vpop.f32.mrb[0].mxu0
    %v429 = vadd.f32 0.0, %v428
    %v430 = vpop.f32.mrb[0].mxu0
    %431 = vmatprep.mubr.f32.mxu0 0.0
    %432 = vmatmul.mubr.f32.gmra.mrb[0].mxu0 %v107
    %v433 = vpop.f32.mrb[0].mxu0
    %v434 = vadd.f32 0.0, %v433
    %v435 = vpop.f32.mrb[0].mxu0
    %436 = vmatprep.mubr.f32.mxu0 0.0
    %437 = vmatmul.mubr.f32.gmra.mrb[0].mxu0 %v108
    %v438 = vpop.f32.mrb[0].mxu0
    %v439 = vadd.f32 0.0, %v438
    %v440 = vpop.f32.mrb[0].mxu0
    %441 = vmatprep.mubr.f32.mxu0 0.0
    %442 = vmatmul.mubr.f32.gmra.mrb[0].mxu0 %v109
    %v443 = vpop.f32.mrb[0].mxu0
    %v444 = vadd.f32 0.0, %v443
    %v445 = vpop.f32.mrb[0].mxu0
    %446 = vmatprep.mubr.f32.mxu0 0.0
    %447 = vmatmul.mubr.f32.gmra.mrb[0].mxu0 %v110
    %v448 = vpop.f32.mrb[0].mxu0
    %v449 = vadd.f32 0.0, %v448
    %v450 = vpop.f32.mrb[0].mxu0
    %451 = vmatprep.mubr.f32.mxu0 0.0
    %452 = vmatmul.mubr.f32.gmra.mrb[0].mxu0 %v111
    %v453 = vpop.f32.mrb[0].mxu0
    %v454 = vadd.f32 0.0, %v453
    %v455 = vpop.f32.mrb[0].mxu0
    %456 = vmatprep.mubr.f32.mxu0 0.0
    %457 = vmatmul.mubr.f32.gmra.mrb[0].mxu0 %v112
    %v458 = vpop.f32.mrb[0].mxu0
    %v459 = vadd.f32 0.0, %v458
    %v460 = vpop.f32.mrb[0].mxu0
    %461 = vmatprep.mubr.f32.mxu0 0.0
    %462 = vmatmul.mubr.f32.gmra.mrb[0].mxu0 %v113
    %v463 = vpop.f32.mrb[0].mxu0
    %v464 = vadd.f32 0.0, %v463
    %v465 = vpop.f32.mrb[0].mxu0
    %466 = vmatprep.mubr.f32.mxu0 0.0
    %467 = vmatmul.mubr.f32.gmra.mrb[0].mxu0 %v114
    %v468 = vpop.f32.mrb[0].mxu0
    %v469 = vadd.f32 0.0, %v468
    %v470 = vpop.f32.mrb[0].mxu0
    %471 = vmatprep.mubr.f32.mxu0 0.0
    %472 = vmatmul.mubr.f32.gmra.mrb[0].mxu0 %v115
    %v473 = vpop.f32.mrb[0].mxu0
    %v474 = vadd.f32 0.0, %v473
    %v475 = vpop.f32.mrb[0].mxu0
    %476 = vmatprep.mubr.f32.mxu0 0.0
    %477 = vmatmul.mubr.f32.gmra.mrb[0].mxu0 %v116
    %v478 = vpop.f32.mrb[0].mxu0
    %v479 = vadd.f32 0.0, %v478
    %v480 = vpop.f32.mrb[0].mxu0
    %481 = vmatprep.mubr.f32.mxu0 0.0
    %482 = vmatmul.mubr.f32.gmra.mrb[0].mxu0 %v117
    %v483 = vpop.f32.mrb[0].mxu0
    %v484 = vadd.f32 0.0, %v483
    %v485 = vpop.f32.mrb[0].mxu0
    %486 = vmatprep.mubr.f32.mxu0 0.0
    %487 = vmatmul.mubr.f32.gmra.mrb[0].mxu0 %v118
    %v488 = vpop.f32.mrb[0].mxu0
    %v489 = vadd.f32 0.0, %v488
    %v490 = vpop.f32.mrb[0].mxu0
    %491 = vmatprep.mubr.f32.mxu0 0.0
    %492 = vmatmul.mubr.f32.gmra.mrb[0].mxu0 %v119
    %v493 = vpop.f32.mrb[0].mxu0
    %v494 = vadd.f32 0.0, %v493
    %v495 = vpop.f32.mrb[0].mxu0
    %496 = vmatprep.mubr.f32.mxu0 0.0
    %497 = vmatmul.mubr.f32.gmra.mrb[0].mxu0 %v120
    %v498 = vpop.f32.mrb[0].mxu0
    %v499 = vadd.f32 0.0, %v498
    %v500 = vpop.f32.mrb[0].mxu0
    %501 = vmatprep.mubr.f32.mxu0 0.0
    %502 = vmatmul.mubr.f32.gmra.mrb[0].mxu0 %v121
    %v503 = vpop.f32.mrb[0].mxu0
    %v504 = vadd.f32 0.0, %v503
    %v505 = vpop.f32.mrb[0].mxu0
    %506 = vmatprep.mubr.f32.mxu0 0.0
    %507 = vmatmul.mubr.f32.gmra.mrb[0].mxu0 %v122
    %v508 = vpop.f32.mrb[0].mxu0
    %v509 = vadd.f32 0.0, %v508
    %v510 = vpop.f32.mrb[0].mxu0
    %511 = vmatprep.mubr.f32.mxu0 0.0
    %512 = vmatmul.mubr.f32.gmra.mrb[0].mxu0 %v123
    %v513 = vpop.f32.mrb[0].mxu0
    %v514 = vadd.f32 0.0, %v513
    %v515 = vpop.f32.mrb[0].mxu0
    %516 = vmatprep.mubr.f32.mxu0 0.0
    %517 = vmatmul.mubr.f32.gmra.mrb[0].mxu0 %v124
    %v518 = vpop.f32.mrb[0].mxu0
    %v519 = vadd.f32 0.0, %v518
    %v520 = vpop.f32.mrb[0].mxu0
    %521 = vmatprep.mubr.f32.mxu0 0.0
    %522 = vmatmul.mubr.f32.gmra.mrb[0].mxu0 %v125
    %v523 = vpop.f32.mrb[0].mxu0
    %v524 = vadd.f32 0.0, %v523
    %v525 = vpop.f32.mrb[0].mxu0
    %526 = vdwg.mxu0
    %527 = vst [vmem:[#allocation8] sm:$0xff] %v209
    %528 = vst [vmem:[#allocation8 + $0x8] sm:$0xff] %v214
    %529 = vst [vmem:[#allocation8 + $0x10] sm:$0xff] %v219
    %530 = vst [vmem:[#allocation8 + $0x18] sm:$0xff] %v224
    %531 = vst [vmem:[#allocation8 + $0x20] sm:$0xff] %v229
    %532 = vst [vmem:[#allocation8 + $0x28] sm:$0xff] %v234
    %533 = vst [vmem:[#allocation8 + $0x30] sm:$0xff] %v239
    %534 = vst [vmem:[#allocation8 + $0x38] sm:$0xff] %v244
    %535 = vst [vmem:[#allocation8 + $0x40] sm:$0xff] %v249
    %536 = vst [vmem:[#allocation8 + $0x48] sm:$0xff] %v254
    %537 = vst [vmem:[#allocation8 + $0x50] sm:$0xff] %v259
    %538 = vst [vmem:[#allocation8 + $0x58] sm:$0xff] %v264
    %539 = vst [vmem:[#allocation8 + $0x60] sm:$0xff] %v269
    %540 = vst [vmem:[#allocation8 + $0x68] sm:$0xff] %v274
    %541 = vst [vmem:[#allocation8 + $0x70] sm:$0xff] %v279
    %542 = vst [vmem:[#allocation8 + $0x78] sm:$0xff] %v284
    %543 = vst [vmem:[#allocation8 + $0x80] sm:$0xff] %v289
    %544 = vst [vmem:[#allocation8 + $0x88] sm:$0xff] %v294
    %545 = vst [vmem:[#allocation8 + $0x90] sm:$0xff] %v299
    %546 = vst [vmem:[#allocation8 + $0x98] sm:$0xff] %v304
    %547 = vst [vmem:[#allocation8 + $0xa0] sm:$0xff] %v309
    %548 = vst [vmem:[#allocation8 + $0xa8] sm:$0xff] %v314
    %549 = vst [vmem:[#allocation8 + $0xb0] sm:$0xff] %v319
    %550 = vst [vmem:[#allocation8 + $0xb8] sm:$0xff] %v324
    %551 = vst [vmem:[#allocation8 + $0xc0] sm:$0xff] %v329
    %552 = vst [vmem:[#allocation8 + $0xc8] sm:$0xff] %v334
    %553 = vst [vmem:[#allocation8 + $0xd0] sm:$0xff] %v339
    %554 = vst [vmem:[#allocation8 + $0xd8] sm:$0xff] %v344
    %555 = vst [vmem:[#allocation8 + $0xe0] sm:$0xff] %v349
    %556 = vst [vmem:[#allocation8 + $0xe8] sm:$0xff] %v354
    %557 = vst [vmem:[#allocation8 + $0xf0] sm:$0xff] %v359
    %558 = vst [vmem:[#allocation8 + $0xf8] sm:$0xff] %v364
    %559 = vst [vmem:[#allocation8 + $0x100] sm:$0xff] %v369
    %560 = vst [vmem:[#allocation8 + $0x108] sm:$0xff] %v374
    %561 = vst [vmem:[#allocation8 + $0x110] sm:$0xff] %v379
    %562 = vst [vmem:[#allocation8 + $0x118] sm:$0xff] %v384
    %563 = vst [vmem:[#allocation8 + $0x120] sm:$0xff] %v389
    %564 = vst [vmem:[#allocation8 + $0x128] sm:$0xff] %v394
    %565 = vst [vmem:[#allocation8 + $0x130] sm:$0xff] %v399
    %566 = vst [vmem:[#allocation8 + $0x138] sm:$0xff] %v404
    %567 = vst [vmem:[#allocation8 + $0x140] sm:$0xff] %v409
    %568 = vst [vmem:[#allocation8 + $0x148] sm:$0xff] %v414
    %569 = vst [vmem:[#allocation8 + $0x150] sm:$0xff] %v419
    %570 = vst [vmem:[#allocation8 + $0x158] sm:$0xff] %v424
    %571 = vst [vmem:[#allocation8 + $0x160] sm:$0xff] %v429
    %572 = vst [vmem:[#allocation8 + $0x168] sm:$0xff] %v434
    %573 = vst [vmem:[#allocation8 + $0x170] sm:$0xff] %v439
    %574 = vst [vmem:[#allocation8 + $0x178] sm:$0xff] %v444
    %575 = vst [vmem:[#allocation8 + $0x180] sm:$0xff] %v449
    %576 = vst [vmem:[#allocation8 + $0x188] sm:$0xff] %v454
    %577 = vst [vmem:[#allocation8 + $0x190] sm:$0xff] %v459
    %578 = vst [vmem:[#allocation8 + $0x198] sm:$0xff] %v464
    %579 = vst [vmem:[#allocation8 + $0x1a0] sm:$0xff] %v469
    %580 = vst [vmem:[#allocation8 + $0x1a8] sm:$0xff] %v474
    %581 = vst [vmem:[#allocation8 + $0x1b0] sm:$0xff] %v479
    %582 = vst [vmem:[#allocation8 + $0x1b8] sm:$0xff] %v484
    %583 = vst [vmem:[#allocation8 + $0x1c0] sm:$0xff] %v489
    %584 = vst [vmem:[#allocation8 + $0x1c8] sm:$0xff] %v494
    %585 = vst [vmem:[#allocation8 + $0x1d0] sm:$0xff] %v499
    %586 = vst [vmem:[#allocation8 + $0x1d8] sm:$0xff] %v504
    %587 = vst [vmem:[#allocation8 + $0x1e0] sm:$0xff] %v509
    %588 = vst [vmem:[#allocation8 + $0x1e8] sm:$0xff] %v514
    %589 = vst [vmem:[#allocation8 + $0x1f0] sm:$0xff] %v519
    %590 = vst [vmem:[#allocation8 + $0x1f8] sm:$0xff] %v524
    %v591 = vadd.f32 %v209, %v214
    %v592 = vadd.f32 %v591, %v219
    %v593 = vadd.f32 %v592, %v224
    %v594 = vadd.f32 %v593, %v229
    %v595 = vadd.f32 %v594, %v234
    %v596 = vadd.f32 %v595, %v239
    %v597 = vadd.f32 %v596, %v244
    %v598 = vadd.f32 %v597, %v249
    %v599 = vadd.f32 %v598, %v254
    %v600 = vadd.f32 %v599, %v259
    %v601 = vadd.f32 %v600, %v264
    %v602 = vadd.f32 %v601, %v269
    %v603 = vadd.f32 %v602, %v274
    %v604 = vadd.f32 %v603, %v279
    %v605 = vadd.f32 %v604, %v284
    %v606 = vadd.f32 %v605, %v289
    %v607 = vadd.f32 %v606, %v294
    %v608 = vadd.f32 %v607, %v299
    %v609 = vadd.f32 %v608, %v304
    %v610 = vadd.f32 %v609, %v309
    %v611 = vadd.f32 %v610, %v314
    %v612 = vadd.f32 %v611, %v319
    %v613 = vadd.f32 %v612, %v324
    %v614 = vadd.f32 %v613, %v329
    %v615 = vadd.f32 %v614, %v334
    %v616 = vadd.f32 %v615, %v339
    %v617 = vadd.f32 %v616, %v344
    %v618 = vadd.f32 %v617, %v349
    %v619 = vadd.f32 %v618, %v354
    %v620 = vadd.f32 %v619, %v359
    %v621 = vadd.f32 %v620, %v364
    %v622 = vadd.f32 %v621, %v369
    %v623 = vadd.f32 %v622, %v374
    %v624 = vadd.f32 %v623, %v379
    %v625 = vadd.f32 %v624, %v384
    %v626 = vadd.f32 %v625, %v389
    %v627 = vadd.f32 %v626, %v394
    %v628 = vadd.f32 %v627, %v399
    %v629 = vadd.f32 %v628, %v404
    %v630 = vadd.f32 %v629, %v409
    %v631 = vadd.f32 %v630, %v414
    %v632 = vadd.f32 %v631, %v419
    %v633 = vadd.f32 %v632, %v424
    %v634 = vadd.f32 %v633, %v429
    %v635 = vadd.f32 %v634, %v434
    %v636 = vadd.f32 %v635, %v439
    %v637 = vadd.f32 %v636, %v444
    %v638 = vadd.f32 %v637, %v449
    %v639 = vadd.f32 %v638, %v454
    %v640 = vadd.f32 %v639, %v459
    %v641 = vadd.f32 %v640, %v464
    %v642 = vadd.f32 %v641, %v469
    %v643 = vadd.f32 %v642, %v474
    %v644 = vadd.f32 %v643, %v479
    %v645 = vadd.f32 %v644, %v484
    %v646 = vadd.f32 %v645, %v489
    %v647 = vadd.f32 %v646, %v494
    %v648 = vadd.f32 %v647, %v499
    %v649 = vadd.f32 %v648, %v504
    %v650 = vadd.f32 %v649, %v509
    %v651 = vadd.f32 %v650, %v514
    %v652 = vadd.f32 %v651, %v519
    %v653 = vadd.f32 %v652, %v524
    %v654 = vrot.slane %v653, 4
    %v655 = vadd.f32 %v653, %v654
    %v656 = vrot.slane %v655, 2
    %v657 = vadd.f32 %v655, %v656
    %v658 = vrot.slane %v657, 1
    %v659 = vadd.f32 %v657, %v658
    %v660 = vmul.f32 %v209, %v209
    %v661 = vmul.f32 %v214, %v214
    %v662 = vmul.f32 %v219, %v219
    %v663 = vmul.f32 %v224, %v224
    %v664 = vmul.f32 %v229, %v229
    %v665 = vmul.f32 %v234, %v234
    %v666 = vmul.f32 %v239, %v239
    %v667 = vmul.f32 %v244, %v244
    %v668 = vmul.f32 %v249, %v249
    %v669 = vmul.f32 %v254, %v254
    %v670 = vmul.f32 %v259, %v259
    %v671 = vmul.f32 %v264, %v264
    %v672 = vmul.f32 %v269, %v269
    %v673 = vmul.f32 %v274, %v274
    %v674 = vmul.f32 %v279, %v279
    %v675 = vmul.f32 %v284, %v284
    %v676 = vmul.f32 %v289, %v289
    %v677 = vmul.f32 %v294, %v294
    %v678 = vmul.f32 %v299, %v299
    %v679 = vmul.f32 %v304, %v304
    %v680 = vmul.f32 %v309, %v309
    %v681 = vmul.f32 %v314, %v314
    %v682 = vmul.f32 %v319, %v319
    %v683 = vmul.f32 %v324, %v324
    %v684 = vmul.f32 %v329, %v329
    %v685 = vmul.f32 %v334, %v334
    %v686 = vmul.f32 %v339, %v339
    %v687 = vmul.f32 %v344, %v344
    %v688 = vmul.f32 %v349, %v349
    %v689 = vmul.f32 %v354, %v354
    %v690 = vmul.f32 %v359, %v359
    %v691 = vmul.f32 %v364, %v364
    %v692 = vmul.f32 %v369, %v369
    %v693 = vmul.f32 %v374, %v374
    %v694 = vmul.f32 %v379, %v379
    %v695 = vmul.f32 %v384, %v384
    %v696 = vmul.f32 %v389, %v389
    %v697 = vmul.f32 %v394, %v394
    %v698 = vmul.f32 %v399, %v399
    %v699 = vmul.f32 %v404, %v404
    %v700 = vmul.f32 %v409, %v409
    %v701 = vmul.f32 %v414, %v414
    %v702 = vmul.f32 %v419, %v419
    %v703 = vmul.f32 %v424, %v424
    %v704 = vmul.f32 %v429, %v429
    %v705 = vmul.f32 %v434, %v434
    %v706 = vmul.f32 %v439, %v439
    %v707 = vmul.f32 %v444, %v444
    %v708 = vmul.f32 %v449, %v449
    %v709 = vmul.f32 %v454, %v454
    %v710 = vmul.f32 %v459, %v459
    %v711 = vmul.f32 %v464, %v464
    %v712 = vmul.f32 %v469, %v469
    %v713 = vmul.f32 %v474, %v474
    %v714 = vmul.f32 %v479, %v479
    %v715 = vmul.f32 %v484, %v484
    %v716 = vmul.f32 %v489, %v489
    %v717 = vmul.f32 %v494, %v494
    %v718 = vmul.f32 %v499, %v499
    %v719 = vmul.f32 %v504, %v504
    %v720 = vmul.f32 %v509, %v509
    %v721 = vmul.f32 %v514, %v514
    %v722 = vmul.f32 %v519, %v519
    %v723 = vmul.f32 %v524, %v524
    %v724 = vadd.f32 %v660, %v661
    %v725 = vadd.f32 %v724, %v662
    %v726 = vadd.f32 %v725, %v663
    %v727 = vadd.f32 %v726, %v664
    %v728 = vadd.f32 %v727, %v665
    %v729 = vadd.f32 %v728, %v666
    %v730 = vadd.f32 %v729, %v667
    %v731 = vadd.f32 %v730, %v668
    %v732 = vadd.f32 %v731, %v669
    %v733 = vadd.f32 %v732, %v670
    %v734 = vadd.f32 %v733, %v671
    %v735 = vadd.f32 %v734, %v672
    %v736 = vadd.f32 %v735, %v673
    %v737 = vadd.f32 %v736, %v674
    %v738 = vadd.f32 %v737, %v675
    %v739 = vadd.f32 %v738, %v676
    %v740 = vadd.f32 %v739, %v677
    %v741 = vadd.f32 %v740, %v678
    %v742 = vadd.f32 %v741, %v679
    %v743 = vadd.f32 %v742, %v680
    %v744 = vadd.f32 %v743, %v681
    %v745 = vadd.f32 %v744, %v682
    %v746 = vadd.f32 %v745, %v683
    %v747 = vadd.f32 %v746, %v684
    %v748 = vadd.f32 %v747, %v685
    %v749 = vadd.f32 %v748, %v686
    %v750 = vadd.f32 %v749, %v687
    %v751 = vadd.f32 %v750, %v688
    %v752 = vadd.f32 %v751, %v689
    %v753 = vadd.f32 %v752, %v690
    %v754 = vadd.f32 %v753, %v691
    %v755 = vadd.f32 %v754, %v692
    %v756 = vadd.f32 %v755, %v693
    %v757 = vadd.f32 %v756, %v694
    %v758 = vadd.f32 %v757, %v695
    %v759 = vadd.f32 %v758, %v696
    %v760 = vadd.f32 %v759, %v697
    %v761 = vadd.f32 %v760, %v698
    %v762 = vadd.f32 %v761, %v699
    %v763 = vadd.f32 %v762, %v700
    %v764 = vadd.f32 %v763, %v701
    %v765 = vadd.f32 %v764, %v702
    %v766 = vadd.f32 %v765, %v703
    %v767 = vadd.f32 %v766, %v704
    %v768 = vadd.f32 %v767, %v705
    %v769 = vadd.f32 %v768, %v706
    %v770 = vadd.f32 %v769, %v707
    %v771 = vadd.f32 %v770, %v708
    %v772 = vadd.f32 %v771, %v709
    %v773 = vadd.f32 %v772, %v710
    %v774 = vadd.f32 %v773, %v711
    %v775 = vadd.f32 %v774, %v712
    %v776 = vadd.f32 %v775, %v713
    %v777 = vadd.f32 %v776, %v714
    %v778 = vadd.f32 %v777, %v715
    %v779 = vadd.f32 %v778, %v716
    %v780 = vadd.f32 %v779, %v717
    %v781 = vadd.f32 %v780, %v718
    %v782 = vadd.f32 %v781, %v719
    %v783 = vadd.f32 %v782, %v720
    %v784 = vadd.f32 %v783, %v721
    %v785 = vadd.f32 %v784, %v722
    %v786 = vadd.f32 %v785, %v723
    %v787 = vrot.slane %v786, 4
    %v788 = vadd.f32 %v786, %v787
    %v789 = vrot.slane %v788, 2
    %v790 = vadd.f32 %v788, %v789
    %v791 = vrot.slane %v790, 1
    %v792 = vadd.f32 %v790, %v791
    %vm793 = vcmask 1040384
    %v794 = vsel %vm793, %v659, %v792
    %vm795 = vcmask 1041408
    %v796 = vsel %vm795, %v794, 0.0
    %797 = vst [vmem:[#allocation11] sm:$0xff] %v796
    %v798 = vld [vmem:[#allocation7] sm:$0xff]
    %v799 = vld [vmem:[#allocation7 + $0x8] sm:$0xff]
    %v800 = vld [vmem:[#allocation7 + $0x10] sm:$0xff]
    %v801 = vld [vmem:[#allocation7 + $0x18] sm:$0xff]
    %v802 = vld [vmem:[#allocation7 + $0x20] sm:$0xff]
    %v803 = vld [vmem:[#allocation7 + $0x28] sm:$0xff]
    %v804 = vld [vmem:[#allocation7 + $0x30] sm:$0xff]
    %v805 = vld [vmem:[#allocation7 + $0x38] sm:$0xff]
    %v806 = vld [vmem:[#allocation7 + $0x40] sm:$0xff]
    %v807 = vld [vmem:[#allocation7 + $0x48] sm:$0xff]
    %v808 = vld [vmem:[#allocation7 + $0x50] sm:$0xff]
    %v809 = vld [vmem:[#allocation7 + $0x58] sm:$0xff]
    %v810 = vld [vmem:[#allocation7 + $0x60] sm:$0xff]
    %v811 = vld [vmem:[#allocation7 + $0x68] sm:$0xff]
    %v812 = vld [vmem:[#allocation7 + $0x70] sm:$0xff]
    %v813 = vld [vmem:[#allocation7 + $0x78] sm:$0xff]
    %814 = vmatprep.subr.mxu0 0.0
    %815 = vmatpush1.msra.mxu0 %v798
    %816 = vmatprep.subr.mxu0 0.0
    %817 = vmatpush1.msra.mxu0 %v799
    %818 = vmatprep.subr.mxu0 0.0
    %819 = vmatpush1.msra.mxu0 %v800
    %820 = vmatprep.subr.mxu0 0.0
    %821 = vmatpush1.msra.mxu0 %v801
    %822 = vmatprep.subr.mxu0 0.0
    %823 = vmatpush1.msra.mxu0 %v802
    %824 = vmatprep.subr.mxu0 0.0
    %825 = vmatpush1.msra.mxu0 %v803
    %826 = vmatprep.subr.mxu0 0.0
    %827 = vmatpush1.msra.mxu0 %v804
    %828 = vmatprep.subr.mxu0 0.0
    %829 = vmatpush1.msra.mxu0 %v805
    %830 = vmatprep.subr.mxu0 0.0
    %831 = vmatpush1.msra.mxu0 %v806
    %832 = vmatprep.subr.mxu0 0.0
    %833 = vmatpush1.msra.mxu0 %v807
    %834 = vmatprep.subr.mxu0 0.0
    %835 = vmatpush1.msra.mxu0 %v808
    %836 = vmatprep.subr.mxu0 0.0
    %837 = vmatpush1.msra.mxu0 %v809
    %838 = vmatprep.subr.mxu0 0.0
    %839 = vmatpush1.msra.mxu0 %v810
    %840 = vmatprep.subr.mxu0 0.0
    %841 = vmatpush1.msra.mxu0 %v811
    %842 = vmatprep.subr.mxu0 0.0
    %843 = vmatpush1.msra.mxu0 %v812
    %844 = vmatprep.subr.mxu0 0.0
    %845 = vmatpush1.msra.mxu0 %v813
    %846 = vmatprep.subr.mxu0 0.0
    %847 = vmatpush1.msra.mxu0 0.0
    %848 = vmatprep.subr.mxu0 0.0
    %849 = vmatpush1.msra.mxu0 0.0
    %850 = vmatprep.subr.mxu0 0.0
    %851 = vmatpush1.msra.mxu0 0.0
    %852 = vmatprep.subr.mxu0 0.0
    %853 = vmatpush1.msra.mxu0 0.0
    %854 = vmatprep.subr.mxu0 0.0
    %855 = vmatpush1.msra.mxu0 0.0
    %856 = vmatprep.subr.mxu0 0.0
    %857 = vmatpush1.msra.mxu0 0.0
    %858 = vmatprep.subr.mxu0 0.0
    %859 = vmatpush1.msra.mxu0 0.0
    %860 = vmatprep.subr.mxu0 0.0
    %861 = vmatpush1.msra.mxu0 0.0
    %862 = vmatprep.subr.mxu0 0.0
    %863 = vmatpush1.msra.mxu0 0.0
    %864 = vmatprep.subr.mxu0 0.0
    %865 = vmatpush1.msra.mxu0 0.0
    %866 = vmatprep.subr.mxu0 0.0
    %867 = vmatpush1.msra.mxu0 0.0
    %868 = vmatprep.subr.mxu0 0.0
    %869 = vmatpush1.msra.mxu0 0.0
    %870 = vmatprep.subr.mxu0 0.0
    %871 = vmatpush1.msra.mxu0 0.0
    %872 = vmatprep.subr.mxu0 0.0
    %873 = vmatpush1.msra.mxu0 0.0
    %874 = vmatprep.subr.mxu0 0.0
    %875 = vmatpush1.msra.mxu0 0.0
    %876 = vmatprep.subr.mxu0 0.0
    %877 = vmatpush1.msra.mxu0 0.0
    %878 = vmatprep.mubr.f32.mxu0 0.0
    %879 = vmatmul.mubr.f32.gmra.mrb[0].mxu0 %v62
    %v880 = vpop.f32.mrb[0].mxu0
    %v881 = vadd.f32 0.0, %v880
    %v882 = vpop.f32.mrb[0].mxu0
    %883 = vmatprep.mubr.f32.mxu0 0.0
    %884 = vmatmul.mubr.f32.gmra.mrb[0].mxu0 %v63
    %v885 = vpop.f32.mrb[0].mxu0
    %v886 = vadd.f32 0.0, %v885
    %v887 = vpop.f32.mrb[0].mxu0
    %888 = vmatprep.mubr.f32.mxu0 0.0
    %889 = vmatmul.mubr.f32.gmra.mrb[0].mxu0 %v64
    %v890 = vpop.f32.mrb[0].mxu0
    %v891 = vadd.f32 0.0, %v890
    %v892 = vpop.f32.mrb[0].mxu0
    %893 = vmatprep.mubr.f32.mxu0 0.0
    %894 = vmatmul.mubr.f32.gmra.mrb[0].mxu0 %v65
    %v895 = vpop.f32.mrb[0].mxu0
    %v896 = vadd.f32 0.0, %v895
    %v897 = vpop.f32.mrb[0].mxu0
    %898 = vmatprep.mubr.f32.mxu0 0.0
    %899 = vmatmul.mubr.f32.gmra.mrb[0].mxu0 %v66
    %v900 = vpop.f32.mrb[0].mxu0
    %v901 = vadd.f32 0.0, %v900
    %v902 = vpop.f32.mrb[0].mxu0
    %903 = vmatprep.mubr.f32.mxu0 0.0
    %904 = vmatmul.mubr.f32.gmra.mrb[0].mxu0 %v67
    %v905 = vpop.f32.mrb[0].mxu0
    %v906 = vadd.f32 0.0, %v905
    %v907 = vpop.f32.mrb[0].mxu0
    %908 = vmatprep.mubr.f32.mxu0 0.0
    %909 = vmatmul.mubr.f32.gmra.mrb[0].mxu0 %v68
    %v910 = vpop.f32.mrb[0].mxu0
    %v911 = vadd.f32 0.0, %v910
    %v912 = vpop.f32.mrb[0].mxu0
    %913 = vmatprep.mubr.f32.mxu0 0.0
    %914 = vmatmul.mubr.f32.gmra.mrb[0].mxu0 %v69
    %v915 = vpop.f32.mrb[0].mxu0
    %v916 = vadd.f32 0.0, %v915
    %v917 = vpop.f32.mrb[0].mxu0
    %918 = vmatprep.mubr.f32.mxu0 0.0
    %919 = vmatmul.mubr.f32.gmra.mrb[0].mxu0 %v70
    %v920 = vpop.f32.mrb[0].mxu0
    %v921 = vadd.f32 0.0, %v920
    %v922 = vpop.f32.mrb[0].mxu0
    %923 = vmatprep.mubr.f32.mxu0 0.0
    %924 = vmatmul.mubr.f32.gmra.mrb[0].mxu0 %v71
    %v925 = vpop.f32.mrb[0].mxu0
    %v926 = vadd.f32 0.0, %v925
    %v927 = vpop.f32.mrb[0].mxu0
    %928 = vmatprep.mubr.f32.mxu0 0.0
    %929 = vmatmul.mubr.f32.gmra.mrb[0].mxu0 %v72
    %v930 = vpop.f32.mrb[0].mxu0
    %v931 = vadd.f32 0.0, %v930
    %v932 = vpop.f32.mrb[0].mxu0
    %933 = vmatprep.mubr.f32.mxu0 0.0
    %934 = vmatmul.mubr.f32.gmra.mrb[0].mxu0 %v73
    %v935 = vpop.f32.mrb[0].mxu0
    %v936 = vadd.f32 0.0, %v935
    %v937 = vpop.f32.mrb[0].mxu0
    %938 = vmatprep.mubr.f32.mxu0 0.0
    %939 = vmatmul.mubr.f32.gmra.mrb[0].mxu0 %v74
    %v940 = vpop.f32.mrb[0].mxu0
    %v941 = vadd.f32 0.0, %v940
    %v942 = vpop.f32.mrb[0].mxu0
    %943 = vmatprep.mubr.f32.mxu0 0.0
    %944 = vmatmul.mubr.f32.gmra.mrb[0].mxu0 %v75
    %v945 = vpop.f32.mrb[0].mxu0
    %v946 = vadd.f32 0.0, %v945
    %v947 = vpop.f32.mrb[0].mxu0
    %948 = vmatprep.mubr.f32.mxu0 0.0
    %949 = vmatmul.mubr.f32.gmra.mrb[0].mxu0 %v76
    %v950 = vpop.f32.mrb[0].mxu0
    %v951 = vadd.f32 0.0, %v950
    %v952 = vpop.f32.mrb[0].mxu0
    %953 = vmatprep.mubr.f32.mxu0 0.0
    %954 = vmatmul.mubr.f32.gmra.mrb[0].mxu0 %v77
    %v955 = vpop.f32.mrb[0].mxu0
    %v956 = vadd.f32 0.0, %v955
    %v957 = vpop.f32.mrb[0].mxu0
    %958 = vmatprep.mubr.f32.mxu0 0.0
    %959 = vmatmul.mubr.f32.gmra.mrb[0].mxu0 %v78
    %v960 = vpop.f32.mrb[0].mxu0
    %v961 = vadd.f32 0.0, %v960
    %v962 = vpop.f32.mrb[0].mxu0
    %963 = vmatprep.mubr.f32.mxu0 0.0
    %964 = vmatmul.mubr.f32.gmra.mrb[0].mxu0 %v79
    %v965 = vpop.f32.mrb[0].mxu0
    %v966 = vadd.f32 0.0, %v965
    %v967 = vpop.f32.mrb[0].mxu0
    %968 = vmatprep.mubr.f32.mxu0 0.0
    %969 = vmatmul.mubr.f32.gmra.mrb[0].mxu0 %v80
    %v970 = vpop.f32.mrb[0].mxu0
    %v971 = vadd.f32 0.0, %v970
    %v972 = vpop.f32.mrb[0].mxu0
    %973 = vmatprep.mubr.f32.mxu0 0.0
    %974 = vmatmul.mubr.f32.gmra.mrb[0].mxu0 %v81
    %v975 = vpop.f32.mrb[0].mxu0
    %v976 = vadd.f32 0.0, %v975
    %v977 = vpop.f32.mrb[0].mxu0
    %978 = vmatprep.mubr.f32.mxu0 0.0
    %979 = vmatmul.mubr.f32.gmra.mrb[0].mxu0 %v82
    %v980 = vpop.f32.mrb[0].mxu0
    %v981 = vadd.f32 0.0, %v980
    %v982 = vpop.f32.mrb[0].mxu0
    %983 = vmatprep.mubr.f32.mxu0 0.0
    %984 = vmatmul.mubr.f32.gmra.mrb[0].mxu0 %v83
    %v985 = vpop.f32.mrb[0].mxu0
    %v986 = vadd.f32 0.0, %v985
    %v987 = vpop.f32.mrb[0].mxu0
    %988 = vmatprep.mubr.f32.mxu0 0.0
    %989 = vmatmul.mubr.f32.gmra.mrb[0].mxu0 %v84
    %v990 = vpop.f32.mrb[0].mxu0
    %v991 = vadd.f32 0.0, %v990
    %v992 = vpop.f32.mrb[0].mxu0
    %993 = vmatprep.mubr.f32.mxu0 0.0
    %994 = vmatmul.mubr.f32.gmra.mrb[0].mxu0 %v85
    %v995 = vpop.f32.mrb[0].mxu0
    %v996 = vadd.f32 0.0, %v995
    %v997 = vpop.f32.mrb[0].mxu0
    %998 = vmatprep.mubr.f32.mxu0 0.0
    %999 = vmatmul.mubr.f32.gmra.mrb[0].mxu0 %v86
    %v1000 = vpop.f32.mrb[0].mxu0
    %v1001 = vadd.f32 0.0, %v1000
    %v1002 = vpop.f32.mrb[0].mxu0
    %1003 = vmatprep.mubr.f32.mxu0 0.0
    %1004 = vmatmul.mubr.f32.gmra.mrb[0].mxu0 %v87
    %v1005 = vpop.f32.mrb[0].mxu0
    %v1006 = vadd.f32 0.0, %v1005
    %v1007 = vpop.f32.mrb[0].mxu0
    %1008 = vmatprep.mubr.f32.mxu0 0.0
    %1009 = vmatmul.mubr.f32.gmra.mrb[0].mxu0 %v88
    %v1010 = vpop.f32.mrb[0].mxu0
    %v1011 = vadd.f32 0.0, %v1010
    %v1012 = vpop.f32.mrb[0].mxu0
    %1013 = vmatprep.mubr.f32.mxu0 0.0
    %1014 = vmatmul.mubr.f32.gmra.mrb[0].mxu0 %v89
    %v1015 = vpop.f32.mrb[0].mxu0
    %v1016 = vadd.f32 0.0, %v1015
    %v1017 = vpop.f32.mrb[0].mxu0
    %1018 = vmatprep.mubr.f32.mxu0 0.0
    %1019 = vmatmul.mubr.f32.gmra.mrb[0].mxu0 %v90
    %v1020 = vpop.f32.mrb[0].mxu0
    %v1021 = vadd.f32 0.0, %v1020
    %v1022 = vpop.f32.mrb[0].mxu0
    %1023 = vmatprep.mubr.f32.mxu0 0.0
    %1024 = vmatmul.mubr.f32.gmra.mrb[0].mxu0 %v91
    %v1025 = vpop.f32.mrb[0].mxu0
    %v1026 = vadd.f32 0.0, %v1025
    %v1027 = vpop.f32.mrb[0].mxu0
    %1028 = vmatprep.mubr.f32.mxu0 0.0
    %1029 = vmatmul.mubr.f32.gmra.mrb[0].mxu0 %v92
    %v1030 = vpop.f32.mrb[0].mxu0
    %v1031 = vadd.f32 0.0, %v1030
    %v1032 = vpop.f32.mrb[0].mxu0
    %1033 = vmatprep.mubr.f32.mxu0 0.0
    %1034 = vmatmul.mubr.f32.gmra.mrb[0].mxu0 %v93
    %v1035 = vpop.f32.mrb[0].mxu0
    %v1036 = vadd.f32 0.0, %v1035
    %v1037 = vpop.f32.mrb[0].mxu0
    %1038 = vmatprep.mubr.f32.mxu0 0.0
    %1039 = vmatmul.mubr.f32.gmra.mrb[0].mxu0 %v94
    %v1040 = vpop.f32.mrb[0].mxu0
    %v1041 = vadd.f32 0.0, %v1040
    %v1042 = vpop.f32.mrb[0].mxu0
    %1043 = vmatprep.mubr.f32.mxu0 0.0
    %1044 = vmatmul.mubr.f32.gmra.mrb[0].mxu0 %v95
    %v1045 = vpop.f32.mrb[0].mxu0
    %v1046 = vadd.f32 0.0, %v1045
    %v1047 = vpop.f32.mrb[0].mxu0
    %1048 = vmatprep.mubr.f32.mxu0 0.0
    %1049 = vmatmul.mubr.f32.gmra.mrb[0].mxu0 %v96
    %v1050 = vpop.f32.mrb[0].mxu0
    %v1051 = vadd.f32 0.0, %v1050
    %v1052 = vpop.f32.mrb[0].mxu0
    %1053 = vmatprep.mubr.f32.mxu0 0.0
    %1054 = vmatmul.mubr.f32.gmra.mrb[0].mxu0 %v97
    %v1055 = vpop.f32.mrb[0].mxu0
    %v1056 = vadd.f32 0.0, %v1055
    %v1057 = vpop.f32.mrb[0].mxu0
    %1058 = vmatprep.mubr.f32.mxu0 0.0
    %1059 = vmatmul.mubr.f32.gmra.mrb[0].mxu0 %v98
    %v1060 = vpop.f32.mrb[0].mxu0
    %v1061 = vadd.f32 0.0, %v1060
    %v1062 = vpop.f32.mrb[0].mxu0
    %1063 = vmatprep.mubr.f32.mxu0 0.0
    %1064 = vmatmul.mubr.f32.gmra.mrb[0].mxu0 %v99
    %v1065 = vpop.f32.mrb[0].mxu0
    %v1066 = vadd.f32 0.0, %v1065
    %v1067 = vpop.f32.mrb[0].mxu0
    %1068 = vmatprep.mubr.f32.mxu0 0.0
    %1069 = vmatmul.mubr.f32.gmra.mrb[0].mxu0 %v100
    %v1070 = vpop.f32.mrb[0].mxu0
    %v1071 = vadd.f32 0.0, %v1070
    %v1072 = vpop.f32.mrb[0].mxu0
    %1073 = vmatprep.mubr.f32.mxu0 0.0
    %1074 = vmatmul.mubr.f32.gmra.mrb[0].mxu0 %v101
    %v1075 = vpop.f32.mrb[0].mxu0
    %v1076 = vadd.f32 0.0, %v1075
    %v1077 = vpop.f32.mrb[0].mxu0
    %1078 = vmatprep.mubr.f32.mxu0 0.0
    %1079 = vmatmul.mubr.f32.gmra.mrb[0].mxu0 %v102
    %v1080 = vpop.f32.mrb[0].mxu0
    %v1081 = vadd.f32 0.0, %v1080
    %v1082 = vpop.f32.mrb[0].mxu0
    %1083 = vmatprep.mubr.f32.mxu0 0.0
    %1084 = vmatmul.mubr.f32.gmra.mrb[0].mxu0 %v103
    %v1085 = vpop.f32.mrb[0].mxu0
    %v1086 = vadd.f32 0.0, %v1085
    %v1087 = vpop.f32.mrb[0].mxu0
    %1088 = vmatprep.mubr.f32.mxu0 0.0
    %1089 = vmatmul.mubr.f32.gmra.mrb[0].mxu0 %v104
    %v1090 = vpop.f32.mrb[0].mxu0
    %v1091 = vadd.f32 0.0, %v1090
    %v1092 = vpop.f32.mrb[0].mxu0
    %1093 = vmatprep.mubr.f32.mxu0 0.0
    %1094 = vmatmul.mubr.f32.gmra.mrb[0].mxu0 %v105
    %v1095 = vpop.f32.mrb[0].mxu0
    %v1096 = vadd.f32 0.0, %v1095
    %v1097 = vpop.f32.mrb[0].mxu0
    %1098 = vmatprep.mubr.f32.mxu0 0.0
    %1099 = vmatmul.mubr.f32.gmra.mrb[0].mxu0 %v106
    %v1100 = vpop.f32.mrb[0].mxu0
    %v1101 = vadd.f32 0.0, %v1100
    %v1102 = vpop.f32.mrb[0].mxu0
    %1103 = vmatprep.mubr.f32.mxu0 0.0
    %1104 = vmatmul.mubr.f32.gmra.mrb[0].mxu0 %v107
    %v1105 = vpop.f32.mrb[0].mxu0
    %v1106 = vadd.f32 0.0, %v1105
    %v1107 = vpop.f32.mrb[0].mxu0
    %1108 = vmatprep.mubr.f32.mxu0 0.0
    %1109 = vmatmul.mubr.f32.gmra.mrb[0].mxu0 %v108
    %v1110 = vpop.f32.mrb[0].mxu0
    %v1111 = vadd.f32 0.0, %v1110
    %v1112 = vpop.f32.mrb[0].mxu0
    %1113 = vmatprep.mubr.f32.mxu0 0.0
    %1114 = vmatmul.mubr.f32.gmra.mrb[0].mxu0 %v109
    %v1115 = vpop.f32.mrb[0].mxu0
    %v1116 = vadd.f32 0.0, %v1115
    %v1117 = vpop.f32.mrb[0].mxu0
    %1118 = vmatprep.mubr.f32.mxu0 0.0
    %1119 = vmatmul.mubr.f32.gmra.mrb[0].mxu0 %v110
    %v1120 = vpop.f32.mrb[0].mxu0
    %v1121 = vadd.f32 0.0, %v1120
    %v1122 = vpop.f32.mrb[0].mxu0
    %1123 = vmatprep.mubr.f32.mxu0 0.0
    %1124 = vmatmul.mubr.f32.gmra.mrb[0].mxu0 %v111
    %v1125 = vpop.f32.mrb[0].mxu0
    %v1126 = vadd.f32 0.0, %v1125
    %v1127 = vpop.f32.mrb[0].mxu0
    %1128 = vmatprep.mubr.f32.mxu0 0.0
    %1129 = vmatmul.mubr.f32.gmra.mrb[0].mxu0 %v112
    %v1130 = vpop.f32.mrb[0].mxu0
    %v1131 = vadd.f32 0.0, %v1130
    %v1132 = vpop.f32.mrb[0].mxu0
    %1133 = vmatprep.mubr.f32.mxu0 0.0
    %1134 = vmatmul.mubr.f32.gmra.mrb[0].mxu0 %v113
    %v1135 = vpop.f32.mrb[0].mxu0
    %v1136 = vadd.f32 0.0, %v1135
    %v1137 = vpop.f32.mrb[0].mxu0
    %1138 = vmatprep.mubr.f32.mxu0 0.0
    %1139 = vmatmul.mubr.f32.gmra.mrb[0].mxu0 %v114
    %v1140 = vpop.f32.mrb[0].mxu0
    %v1141 = vadd.f32 0.0, %v1140
    %v1142 = vpop.f32.mrb[0].mxu0
    %1143 = vmatprep.mubr.f32.mxu0 0.0
    %1144 = vmatmul.mubr.f32.gmra.mrb[0].mxu0 %v115
    %v1145 = vpop.f32.mrb[0].mxu0
    %v1146 = vadd.f32 0.0, %v1145
    %v1147 = vpop.f32.mrb[0].mxu0
    %1148 = vmatprep.mubr.f32.mxu0 0.0
    %1149 = vmatmul.mubr.f32.gmra.mrb[0].mxu0 %v116
    %v1150 = vpop.f32.mrb[0].mxu0
    %v1151 = vadd.f32 0.0, %v1150
    %v1152 = vpop.f32.mrb[0].mxu0
    %1153 = vmatprep.mubr.f32.mxu0 0.0
    %1154 = vmatmul.mubr.f32.gmra.mrb[0].mxu0 %v117
    %v1155 = vpop.f32.mrb[0].mxu0
    %v1156 = vadd.f32 0.0, %v1155
    %v1157 = vpop.f32.mrb[0].mxu0
    %1158 = vmatprep.mubr.f32.mxu0 0.0
    %1159 = vmatmul.mubr.f32.gmra.mrb[0].mxu0 %v118
    %v1160 = vpop.f32.mrb[0].mxu0
    %v1161 = vadd.f32 0.0, %v1160
    %v1162 = vpop.f32.mrb[0].mxu0
    %1163 = vmatprep.mubr.f32.mxu0 0.0
    %1164 = vmatmul.mubr.f32.gmra.mrb[0].mxu0 %v119
    %v1165 = vpop.f32.mrb[0].mxu0
    %v1166 = vadd.f32 0.0, %v1165
    %v1167 = vpop.f32.mrb[0].mxu0
    %1168 = vmatprep.mubr.f32.mxu0 0.0
    %1169 = vmatmul.mubr.f32.gmra.mrb[0].mxu0 %v120
    %v1170 = vpop.f32.mrb[0].mxu0
    %v1171 = vadd.f32 0.0, %v1170
    %v1172 = vpop.f32.mrb[0].mxu0
    %1173 = vmatprep.mubr.f32.mxu0 0.0
    %1174 = vmatmul.mubr.f32.gmra.mrb[0].mxu0 %v121
    %v1175 = vpop.f32.mrb[0].mxu0
    %v1176 = vadd.f32 0.0, %v1175
    %v1177 = vpop.f32.mrb[0].mxu0
    %1178 = vmatprep.mubr.f32.mxu0 0.0
    %1179 = vmatmul.mubr.f32.gmra.mrb[0].mxu0 %v122
    %v1180 = vpop.f32.mrb[0].mxu0
    %v1181 = vadd.f32 0.0, %v1180
    %v1182 = vpop.f32.mrb[0].mxu0
    %1183 = vmatprep.mubr.f32.mxu0 0.0
    %1184 = vmatmul.mubr.f32.gmra.mrb[0].mxu0 %v123
    %v1185 = vpop.f32.mrb[0].mxu0
    %v1186 = vadd.f32 0.0, %v1185
    %v1187 = vpop.f32.mrb[0].mxu0
    %1188 = vmatprep.mubr.f32.mxu0 0.0
    %1189 = vmatmul.mubr.f32.gmra.mrb[0].mxu0 %v124
    %v1190 = vpop.f32.mrb[0].mxu0
    %v1191 = vadd.f32 0.0, %v1190
    %v1192 = vpop.f32.mrb[0].mxu0
    %1193 = vmatprep.mubr.f32.mxu0 0.0
    %1194 = vmatmul.mubr.f32.gmra.mrb[0].mxu0 %v125
    %v1195 = vpop.f32.mrb[0].mxu0
    %v1196 = vadd.f32 0.0, %v1195
    %v1197 = vpop.f32.mrb[0].mxu0
    %1198 = vdwg.mxu0
    %1199 = vst [vmem:[#allocation9] sm:$0xff] %v881
    %1200 = vst [vmem:[#allocation9 + $0x8] sm:$0xff] %v886
    %1201 = vst [vmem:[#allocation9 + $0x10] sm:$0xff] %v891
    %1202 = vst [vmem:[#allocation9 + $0x18] sm:$0xff] %v896
    %1203 = vst [vmem:[#allocation9 + $0x20] sm:$0xff] %v901
    %1204 = vst [vmem:[#allocation9 + $0x28] sm:$0xff] %v906
    %1205 = vst [vmem:[#allocation9 + $0x30] sm:$0xff] %v911
    %1206 = vst [vmem:[#allocation9 + $0x38] sm:$0xff] %v916
    %1207 = vst [vmem:[#allocation9 + $0x40] sm:$0xff] %v921
    %1208 = vst [vmem:[#allocation9 + $0x48] sm:$0xff] %v926
    %1209 = vst [vmem:[#allocation9 + $0x50] sm:$0xff] %v931
    %1210 = vst [vmem:[#allocation9 + $0x58] sm:$0xff] %v936
    %1211 = vst [vmem:[#allocation9 + $0x60] sm:$0xff] %v941
    %1212 = vst [vmem:[#allocation9 + $0x68] sm:$0xff] %v946
    %1213 = vst [vmem:[#allocation9 + $0x70] sm:$0xff] %v951
    %1214 = vst [vmem:[#allocation9 + $0x78] sm:$0xff] %v956
    %1215 = vst [vmem:[#allocation9 + $0x80] sm:$0xff] %v961
    %1216 = vst [vmem:[#allocation9 + $0x88] sm:$0xff] %v966
    %1217 = vst [vmem:[#allocation9 + $0x90] sm:$0xff] %v971
    %1218 = vst [vmem:[#allocation9 + $0x98] sm:$0xff] %v976
    %1219 = vst [vmem:[#allocation9 + $0xa0] sm:$0xff] %v981
    %1220 = vst [vmem:[#allocation9 + $0xa8] sm:$0xff] %v986
    %1221 = vst [vmem:[#allocation9 + $0xb0] sm:$0xff] %v991
    %1222 = vst [vmem:[#allocation9 + $0xb8] sm:$0xff] %v996
    %1223 = vst [vmem:[#allocation9 + $0xc0] sm:$0xff] %v1001
    %1224 = vst [vmem:[#allocation9 + $0xc8] sm:$0xff] %v1006
    %1225 = vst [vmem:[#allocation9 + $0xd0] sm:$0xff] %v1011
    %1226 = vst [vmem:[#allocation9 + $0xd8] sm:$0xff] %v1016
    %1227 = vst [vmem:[#allocation9 + $0xe0] sm:$0xff] %v1021
    %1228 = vst [vmem:[#allocation9 + $0xe8] sm:$0xff] %v1026
    %1229 = vst [vmem:[#allocation9 + $0xf0] sm:$0xff] %v1031
    %1230 = vst [vmem:[#allocation9 + $0xf8] sm:$0xff] %v1036
    %1231 = vst [vmem:[#allocation9 + $0x100] sm:$0xff] %v1041
    %1232 = vst [vmem:[#allocation9 + $0x108] sm:$0xff] %v1046
    %1233 = vst [vmem:[#allocation9 + $0x110] sm:$0xff] %v1051
    %1234 = vst [vmem:[#allocation9 + $0x118] sm:$0xff] %v1056
    %1235 = vst [vmem:[#allocation9 + $0x120] sm:$0xff] %v1061
    %1236 = vst [vmem:[#allocation9 + $0x128] sm:$0xff] %v1066
    %1237 = vst [vmem:[#allocation9 + $0x130] sm:$0xff] %v1071
    %1238 = vst [vmem:[#allocation9 + $0x138] sm:$0xff] %v1076
    %1239 = vst [vmem:[#allocation9 + $0x140] sm:$0xff] %v1081
    %1240 = vst [vmem:[#allocation9 + $0x148] sm:$0xff] %v1086
    %1241 = vst [vmem:[#allocation9 + $0x150] sm:$0xff] %v1091
    %1242 = vst [vmem:[#allocation9 + $0x158] sm:$0xff] %v1096
    %1243 = vst [vmem:[#allocation9 + $0x160] sm:$0xff] %v1101
    %1244 = vst [vmem:[#allocation9 + $0x168] sm:$0xff] %v1106
    %1245 = vst [vmem:[#allocation9 + $0x170] sm:$0xff] %v1111
    %1246 = vst [vmem:[#allocation9 + $0x178] sm:$0xff] %v1116
    %1247 = vst [vmem:[#allocation9 + $0x180] sm:$0xff] %v1121
    %1248 = vst [vmem:[#allocation9 + $0x188] sm:$0xff] %v1126
    %1249 = vst [vmem:[#allocation9 + $0x190] sm:$0xff] %v1131
    %1250 = vst [vmem:[#allocation9 + $0x198] sm:$0xff] %v1136
    %1251 = vst [vmem:[#allocation9 + $0x1a0] sm:$0xff] %v1141
    %1252 = vst [vmem:[#allocation9 + $0x1a8] sm:$0xff] %v1146
    %1253 = vst [vmem:[#allocation9 + $0x1b0] sm:$0xff] %v1151
    %1254 = vst [vmem:[#allocation9 + $0x1b8] sm:$0xff] %v1156
    %1255 = vst [vmem:[#allocation9 + $0x1c0] sm:$0xff] %v1161
    %1256 = vst [vmem:[#allocation9 + $0x1c8] sm:$0xff] %v1166
    %1257 = vst [vmem:[#allocation9 + $0x1d0] sm:$0xff] %v1171
    %1258 = vst [vmem:[#allocation9 + $0x1d8] sm:$0xff] %v1176
    %1259 = vst [vmem:[#allocation9 + $0x1e0] sm:$0xff] %v1181
    %1260 = vst [vmem:[#allocation9 + $0x1e8] sm:$0xff] %v1186
    %1261 = vst [vmem:[#allocation9 + $0x1f0] sm:$0xff] %v1191
    %1262 = vst [vmem:[#allocation9 + $0x1f8] sm:$0xff] %v1196
    %v1263 = vadd.f32 %v881, %v886
    %v1264 = vadd.f32 %v1263, %v891
    %v1265 = vadd.f32 %v1264, %v896
    %v1266 = vadd.f32 %v1265, %v901
    %v1267 = vadd.f32 %v1266, %v906
    %v1268 = vadd.f32 %v1267, %v911
    %v1269 = vadd.f32 %v1268, %v916
    %v1270 = vadd.f32 %v1269, %v921
    %v1271 = vadd.f32 %v1270, %v926
    %v1272 = vadd.f32 %v1271, %v931
    %v1273 = vadd.f32 %v1272, %v936
    %v1274 = vadd.f32 %v1273, %v941
    %v1275 = vadd.f32 %v1274, %v946
    %v1276 = vadd.f32 %v1275, %v951
    %v1277 = vadd.f32 %v1276, %v956
    %v1278 = vadd.f32 %v1277, %v961
    %v1279 = vadd.f32 %v1278, %v966
    %v1280 = vadd.f32 %v1279, %v971
    %v1281 = vadd.f32 %v1280, %v976
    %v1282 = vadd.f32 %v1281, %v981
    %v1283 = vadd.f32 %v1282, %v986
    %v1284 = vadd.f32 %v1283, %v991
    %v1285 = vadd.f32 %v1284, %v996
    %v1286 = vadd.f32 %v1285, %v1001
    %v1287 = vadd.f32 %v1286, %v1006
    %v1288 = vadd.f32 %v1287, %v1011
    %v1289 = vadd.f32 %v1288, %v1016
    %v1290 = vadd.f32 %v1289, %v1021
    %v1291 = vadd.f32 %v1290, %v1026
    %v1292 = vadd.f32 %v1291, %v1031
    %v1293 = vadd.f32 %v1292, %v1036
    %v1294 = vadd.f32 %v1293, %v1041
    %v1295 = vadd.f32 %v1294, %v1046
    %v1296 = vadd.f32 %v1295, %v1051
    %v1297 = vadd.f32 %v1296, %v1056
    %v1298 = vadd.f32 %v1297, %v1061
    %v1299 = vadd.f32 %v1298, %v1066
    %v1300 = vadd.f32 %v1299, %v1071
    %v1301 = vadd.f32 %v1300, %v1076
    %v1302 = vadd.f32 %v1301, %v1081
    %v1303 = vadd.f32 %v1302, %v1086
    %v1304 = vadd.f32 %v1303, %v1091
    %v1305 = vadd.f32 %v1304, %v1096
    %v1306 = vadd.f32 %v1305, %v1101
    %v1307 = vadd.f32 %v1306, %v1106
    %v1308 = vadd.f32 %v1307, %v1111
    %v1309 = vadd.f32 %v1308, %v1116
    %v1310 = vadd.f32 %v1309, %v1121
    %v1311 = vadd.f32 %v1310, %v1126
    %v1312 = vadd.f32 %v1311, %v1131
    %v1313 = vadd.f32 %v1312, %v1136
    %v1314 = vadd.f32 %v1313, %v1141
    %v1315 = vadd.f32 %v1314, %v1146
    %v1316 = vadd.f32 %v1315, %v1151
    %v1317 = vadd.f32 %v1316, %v1156
    %v1318 = vadd.f32 %v1317, %v1161
    %v1319 = vadd.f32 %v1318, %v1166
    %v1320 = vadd.f32 %v1319, %v1171
    %v1321 = vadd.f32 %v1320, %v1176
    %v1322 = vadd.f32 %v1321, %v1181
    %v1323 = vadd.f32 %v1322, %v1186
    %v1324 = vadd.f32 %v1323, %v1191
    %v1325 = vadd.f32 %v1324, %v1196
    %v1326 = vrot.slane %v1325, 4
    %v1327 = vadd.f32 %v1325, %v1326
    %v1328 = vrot.slane %v1327, 2
    %v1329 = vadd.f32 %v1327, %v1328
    %v1330 = vrot.slane %v1329, 1
    %v1331 = vadd.f32 %v1329, %v1330
    %v1332 = vmul.f32 %v881, %v881
    %v1333 = vmul.f32 %v886, %v886
    %v1334 = vmul.f32 %v891, %v891
    %v1335 = vmul.f32 %v896, %v896
    %v1336 = vmul.f32 %v901, %v901
    %v1337 = vmul.f32 %v906, %v906
    %v1338 = vmul.f32 %v911, %v911
    %v1339 = vmul.f32 %v916, %v916
    %v1340 = vmul.f32 %v921, %v921
    %v1341 = vmul.f32 %v926, %v926
    %v1342 = vmul.f32 %v931, %v931
    %v1343 = vmul.f32 %v936, %v936
    %v1344 = vmul.f32 %v941, %v941
    %v1345 = vmul.f32 %v946, %v946
    %v1346 = vmul.f32 %v951, %v951
    %v1347 = vmul.f32 %v956, %v956
    %v1348 = vmul.f32 %v961, %v961
    %v1349 = vmul.f32 %v966, %v966
    %v1350 = vmul.f32 %v971, %v971
    %v1351 = vmul.f32 %v976, %v976
    %v1352 = vmul.f32 %v981, %v981
    %v1353 = vmul.f32 %v986, %v986
    %v1354 = vmul.f32 %v991, %v991
    %v1355 = vmul.f32 %v996, %v996
    %v1356 = vmul.f32 %v1001, %v1001
    %v1357 = vmul.f32 %v1006, %v1006
    %v1358 = vmul.f32 %v1011, %v1011
    %v1359 = vmul.f32 %v1016, %v1016
    %v1360 = vmul.f32 %v1021, %v1021
    %v1361 = vmul.f32 %v1026, %v1026
    %v1362 = vmul.f32 %v1031, %v1031
    %v1363 = vmul.f32 %v1036, %v1036
    %v1364 = vmul.f32 %v1041, %v1041
    %v1365 = vmul.f32 %v1046, %v1046
    %v1366 = vmul.f32 %v1051, %v1051
    %v1367 = vmul.f32 %v1056, %v1056
    %v1368 = vmul.f32 %v1061, %v1061
    %v1369 = vmul.f32 %v1066, %v1066
    %v1370 = vmul.f32 %v1071, %v1071
    %v1371 = vmul.f32 %v1076, %v1076
    %v1372 = vmul.f32 %v1081, %v1081
    %v1373 = vmul.f32 %v1086, %v1086
    %v1374 = vmul.f32 %v1091, %v1091
    %v1375 = vmul.f32 %v1096, %v1096
    %v1376 = vmul.f32 %v1101, %v1101
    %v1377 = vmul.f32 %v1106, %v1106
    %v1378 = vmul.f32 %v1111, %v1111
    %v1379 = vmul.f32 %v1116, %v1116
    %v1380 = vmul.f32 %v1121, %v1121
    %v1381 = vmul.f32 %v1126, %v1126
    %v1382 = vmul.f32 %v1131, %v1131
    %v1383 = vmul.f32 %v1136, %v1136
    %v1384 = vmul.f32 %v1141, %v1141
    %v1385 = vmul.f32 %v1146, %v1146
    %v1386 = vmul.f32 %v1151, %v1151
    %v1387 = vmul.f32 %v1156, %v1156
    %v1388 = vmul.f32 %v1161, %v1161
    %v1389 = vmul.f32 %v1166, %v1166
    %v1390 = vmul.f32 %v1171, %v1171
    %v1391 = vmul.f32 %v1176, %v1176
    %v1392 = vmul.f32 %v1181, %v1181
    %v1393 = vmul.f32 %v1186, %v1186
    %v1394 = vmul.f32 %v1191, %v1191
    %v1395 = vmul.f32 %v1196, %v1196
    %v1396 = vadd.f32 %v1332, %v1333
    %v1397 = vadd.f32 %v1396, %v1334
    %v1398 = vadd.f32 %v1397, %v1335
    %v1399 = vadd.f32 %v1398, %v1336
    %v1400 = vadd.f32 %v1399, %v1337
    %v1401 = vadd.f32 %v1400, %v1338
    %v1402 = vadd.f32 %v1401, %v1339
    %v1403 = vadd.f32 %v1402, %v1340
    %v1404 = vadd.f32 %v1403, %v1341
    %v1405 = vadd.f32 %v1404, %v1342
    %v1406 = vadd.f32 %v1405, %v1343
    %v1407 = vadd.f32 %v1406, %v1344
    %v1408 = vadd.f32 %v1407, %v1345
    %v1409 = vadd.f32 %v1408, %v1346
    %v1410 = vadd.f32 %v1409, %v1347
    %v1411 = vadd.f32 %v1410, %v1348
    %v1412 = vadd.f32 %v1411, %v1349
    %v1413 = vadd.f32 %v1412, %v1350
    %v1414 = vadd.f32 %v1413, %v1351
    %v1415 = vadd.f32 %v1414, %v1352
    %v1416 = vadd.f32 %v1415, %v1353
    %v1417 = vadd.f32 %v1416, %v1354
    %v1418 = vadd.f32 %v1417, %v1355
    %v1419 = vadd.f32 %v1418, %v1356
    %v1420 = vadd.f32 %v1419, %v1357
    %v1421 = vadd.f32 %v1420, %v1358
    %v1422 = vadd.f32 %v1421, %v1359
    %v1423 = vadd.f32 %v1422, %v1360
    %v1424 = vadd.f32 %v1423, %v1361
    %v1425 = vadd.f32 %v1424, %v1362
    %v1426 = vadd.f32 %v1425, %v1363
    %v1427 = vadd.f32 %v1426, %v1364
    %v1428 = vadd.f32 %v1427, %v1365
    %v1429 = vadd.f32 %v1428, %v1366
    %v1430 = vadd.f32 %v1429, %v1367
    %v1431 = vadd.f32 %v1430, %v1368
    %v1432 = vadd.f32 %v1431, %v1369
    %v1433 = vadd.f32 %v1432, %v1370
    %v1434 = vadd.f32 %v1433, %v1371
    %v1435 = vadd.f32 %v1434, %v1372
    %v1436 = vadd.f32 %v1435, %v1373
    %v1437 = vadd.f32 %v1436, %v1374
    %v1438 = vadd.f32 %v1437, %v1375
    %v1439 = vadd.f32 %v1438, %v1376
    %v1440 = vadd.f32 %v1439, %v1377
    %v1441 = vadd.f32 %v1440, %v1378
    %v1442 = vadd.f32 %v1441, %v1379
    %v1443 = vadd.f32 %v1442, %v1380
    %v1444 = vadd.f32 %v1443, %v1381
    %v1445 = vadd.f32 %v1444, %v1382
    %v1446 = vadd.f32 %v1445, %v1383
    %v1447 = vadd.f32 %v1446, %v1384
    %v1448 = vadd.f32 %v1447, %v1385
    %v1449 = vadd.f32 %v1448, %v1386
    %v1450 = vadd.f32 %v1449, %v1387
    %v1451 = vadd.f32 %v1450, %v1388
    %v1452 = vadd.f32 %v1451, %v1389
    %v1453 = vadd.f32 %v1452, %v1390
    %v1454 = vadd.f32 %v1453, %v1391
    %v1455 = vadd.f32 %v1454, %v1392
    %v1456 = vadd.f32 %v1455, %v1393
    %v1457 = vadd.f32 %v1456, %v1394
    %v1458 = vadd.f32 %v1457, %v1395
    %v1459 = vrot.slane %v1458, 4
    %v1460 = vadd.f32 %v1458, %v1459
    %v1461 = vrot.slane %v1460, 2
    %v1462 = vadd.f32 %v1460, %v1461
    %v1463 = vrot.slane %v1462, 1
    %v1464 = vadd.f32 %v1462, %v1463
    %v1465 = vsel %vm793, %v1331, %v1464
    %v1466 = vsel %vm795, %v1465, 0.0
    %1467 = vst [vmem:[#allocation12] sm:$0xff] %v1466
    // Predicated region
    $region26: #{tpu_custom_call.1} parent=1 // pred_check
      _
    $region27: #{tpu_custom_call.1} parent=1 // pred_check_branch
      %1469 = sbr.rel (0) target = $region29
    $region28: #{tpu_custom_call.1} parent=1 // pred_region
      %s1471 = ssub.s32 8192, 8192
      %1472 = vsyncadd [#allocation4], %s1471
      %s1473 = sshll.u32 [#allocation8], 4
      %s1474 = int_to_ptr.vmem [resolvable:$true] %s1473
      %1479 = dma.vmem_to_hbm [thread:$0]  %s1474, 8192, %s3, [#allocation4], 128, 128, 8
    $region29: #{tpu_custom_call.1} parent=1 // pred_fallthru
      _
    // Predicated region
    $region30: #{tpu_custom_call.1} parent=1 // pred_check
      _
    $region31: #{tpu_custom_call.1} parent=1 // pred_check_branch
      %1481 = sbr.rel (0) target = $region33
    $region32: #{tpu_custom_call.1} parent=1 // pred_region
      %s1483 = ssub.s32 8192, 8192
      %1484 = vsyncadd [#allocation10], %s1483
      %s1485 = sshll.u32 [#allocation9], 4
      %s1486 = int_to_ptr.vmem [resolvable:$true] %s1485
      %1491 = dma.vmem_to_hbm [thread:$0]  %s1486, 8192, %s4, [#allocation10], 128, 128, 8
    $region33: #{tpu_custom_call.1} parent=1 // pred_fallthru
      _
    // Predicated region
    $region34: #{tpu_custom_call.1} parent=1 // pred_check
      _
    $region35: #{tpu_custom_call.1} parent=1 // pred_check_branch
      %1493 = sbr.rel (0) target = $region37
    $region36: #{tpu_custom_call.1} parent=1 // pred_region
      %s1495 = ssub.s32 128, 128
      %1496 = vsyncadd [#allocation10], %s1495
      %s1498 = sshll.u32 [#allocation11], 4
      %s1499 = int_to_ptr.vmem [resolvable:$true] %s1498
      %1501 = dma.vmem_to_hbm [thread:$0]  %s1499, 128, %s5, [#allocation10]
    $region37: #{tpu_custom_call.1} parent=1 // pred_fallthru
      _
    // Predicated region
    $region38: #{tpu_custom_call.1} parent=1 // pred_check
      _
    $region39: #{tpu_custom_call.1} parent=1 // pred_check_branch
      %1503 = sbr.rel (0) target = $region41
    $region40: #{tpu_custom_call.1} parent=1 // pred_region
      %s1505 = ssub.s32 128, 128
      %1506 = vsyncadd [#allocation13], %s1505
      %s1508 = sshll.u32 [#allocation12], 4
      %s1509 = int_to_ptr.vmem [resolvable:$true] %s1508
      %1511 = dma.vmem_to_hbm [thread:$0]  %s1509, 128, %s6, [#allocation13]
    $region41: #{tpu_custom_call.1} parent=1 // pred_fallthru
      _
    // Predicated region
    $region42: #{tpu_custom_call.1} parent=1 // pred_check
      _
    $region43: #{tpu_custom_call.1} parent=1 // pred_check_branch
      %1513 = sbr.rel (0) target = $region45
    $region44: #{tpu_custom_call.1} parent=1 // pred_region
      %1514 = dma.done [#allocation4], 8192
    $region45: #{tpu_custom_call.1} parent=1 // pred_fallthru
      _
    // Predicated region
    $region46: #{tpu_custom_call.1} parent=1 // pred_check
      _
    $region47: #{tpu_custom_call.1} parent=1 // pred_check_branch
      %1516 = sbr.rel (0) target = $region49
    $region48: #{tpu_custom_call.1} parent=1 // pred_region
      %1517 = dma.done [#allocation10], 8192
    $region49: #{tpu_custom_call.1} parent=1 // pred_fallthru
      _
    // Predicated region
    $region50: #{tpu_custom_call.1} parent=1 // pred_check
      _
    $region51: #{tpu_custom_call.1} parent=1 // pred_check_branch
      %1519 = sbr.rel (0) target = $region53
    $region52: #{tpu_custom_call.1} parent=1 // pred_region
      %1520 = dma.done [#allocation10], 128
    $region53: #{tpu_custom_call.1} parent=1 // pred_fallthru
      _
    // Predicated region
    $region54: #{tpu_custom_call.1} parent=1 // pred_check
      _
    $region55: #{tpu_custom_call.1} parent=1 // pred_check_branch
      %1522 = sbr.rel (0) target = $region57
    $region56: #{tpu_custom_call.1} parent=1 // pred_region
      %1523 = dma.done [#allocation13], 128
    $region57: #{tpu_custom_call.1} parent=1 // pred_fallthru
      _
    %1524 = vsyncpa [#allocation3], 1
    %1525 = vsyncpa [#allocation6], 1
    %1526 = vsyncpa [#allocation4], 1
    %1527 = vsyncpa [#allocation10], 1
    %1528 = vsyncpa [#allocation13], 1

</llo_original>
